<compile_context>
chip_gen: v7x
topology: tpu7x:2x2x1
jax: 0.10.0
libtpu: 0.0.40
codegen_flags: <defaults>
</compile_context>

<pallas_src>
import math
import functools

import jax
import jax.numpy as jnp
from jax import lax
from jax.experimental import pallas as pl
from jax.experimental.pallas import tpu as pltpu

LN_EPS = 1e-5  # torch.nn.LayerNorm default
NEG_BIG = -1e30


def _layernorm(h, gamma, beta):
    """LayerNorm over the last axis, statistics in f32."""
    h = h.astype(jnp.float32)
    mu = jnp.mean(h, axis=-1, keepdims=True)
    var = jnp.mean(jnp.square(h - mu), axis=-1, keepdims=True)
    return ((h - mu) * lax.rsqrt(var + LN_EPS)
            * gamma.astype(jnp.float32) + beta.astype(jnp.float32))


def _gelu_tanh(x):
    # nn.GELU(approximate='tanh'), computed in f32.
    c0 = math.sqrt(2.0 / math.pi)
    return 0.5 * x * (1.0 + jnp.tanh(c0 * (x + 0.044715 * x * x * x)))


def block_kernel(xq_ref, xf_ref,
                 ln1g_ref, ln1b_ref,
                 wq_ref, bq_ref, wk_ref, bk_ref, wv_ref, bv_ref,
                 wap_ref, bap_ref,
                 ln2g_ref, ln2b_ref,
                 wfc_ref, bfc_ref,
                 wmp_ref, bmp_ref,
                 out_ref,
                 *, n_head):
    qi = pl.program_id(1)

    x_row = xq_ref[0].astype(jnp.float32)    # (TQ, C) query-row tile
    x_full = xf_ref[0].astype(jnp.float32)   # (T,  C) whole sequence (for K/V)
    TQ, C = x_row.shape
    T = x_full.shape[0]
    hd = C // n_head
    scale = 1.0 / math.sqrt(hd)
    wdt = wq_ref.dtype                        # compute (MXU) dtype = weight dtype

    f32 = jnp.float32
    ln1g = ln1g_ref[...]
    ln1b = ln1b_ref[...]

    # ---------------- attention branch ----------------
    # Q only for the row tile; K/V for the full sequence.
    h1_row = _layernorm(x_row, ln1g, ln1b).astype(wdt)
    h1_full = _layernorm(x_full, ln1g, ln1b).astype(wdt)

    q = (jnp.dot(h1_row, wq_ref[...], preferred_element_type=f32)
         + bq_ref[...].astype(f32)).astype(wdt)                       # (TQ, C)
    k = (jnp.dot(h1_full, wk_ref[...], preferred_element_type=f32)
         + bk_ref[...].astype(f32)).astype(wdt)                       # (T, C)
    v = (jnp.dot(h1_full, wv_ref[...], preferred_element_type=f32)
         + bv_ref[...].astype(f32)).astype(wdt)                       # (T, C)

    # Causal mask for this row tile (hoisted out of the head loop).
    q_pos = qi * TQ + lax.broadcasted_iota(jnp.int32, (TQ, T), 0)
    k_pos = lax.broadcasted_iota(jnp.int32, (TQ, T), 1)
    causal = k_pos <= q_pos

    # Head-wise attention with rank-hd accumulation into the output
    # projection (no concatenate, no kh.T transpose).
    y_acc = jnp.zeros((TQ, C), f32)
    for h in range(n_head):
        s0, s1 = h * hd, (h + 1) * hd
        qh = q[:, s0:s1]                     # (TQ, hd)
        kh = k[:, s0:s1]                     # (T,  hd)
        vh = v[:, s0:s1]                     # (T,  hd)

        # scores: contract last dims directly (no explicit transpose of kh)
        att = lax.dot_general(qh, kh, (((1,), (1,)), ((), ())),
                              preferred_element_type=f32) * scale     # (TQ, T)
        att = jnp.where(causal, att, jnp.float32(NEG_BIG))
        att = att - jnp.max(att, axis=-1, keepdims=True)
        p = jnp.exp(att)
        # normalization reciprocal on the EUP (approx vrcp)
        p = p * pl.reciprocal(jnp.sum(p, axis=-1, keepdims=True), approx=True)

        yh = jnp.dot(p.astype(wdt), vh, preferred_element_type=f32)   # (TQ, hd)
        y_acc = y_acc + jnp.dot(yh.astype(wdt), wap_ref[s0:s1, :],
                                preferred_element_type=f32)           # (TQ, C)

    y = y_acc + bap_ref[...].astype(f32)
    x1 = x_row + y                           # first residual (f32)

    # ---------------- MLP branch ----------------
    h2 = _layernorm(x1, ln2g_ref[...], ln2b_ref[...]).astype(wdt)
    hfc = (jnp.dot(h2, wfc_ref[...], preferred_element_type=f32)
           + bfc_ref[...].astype(f32))                                # (TQ, 4C)
    g = _gelu_tanh(hfc).astype(wdt)
    m = (jnp.dot(g, wmp_ref[...], preferred_element_type=f32)
         + bmp_ref[...].astype(f32))                                  # (TQ, C)

    # single lane-dense write of the whole tile
    out_ref[0] = (x1 + m).astype(out_ref.dtype)


def _pick_tq(T):
    """Largest query-row tile (<=256) that divides T."""
    for cand in (256, 128, 64, 32, 16, 8):
        if T % cand == 0:
            return cand
    return T


def _vmem_limit_bytes(params, B, T, TQ, C):
    weight_bytes = sum(int(p.size) * p.dtype.itemsize for p in params)
    # x tiles (row + full-seq, double buffered) + f32 intermediates estimate
    tile_bytes = 4 * 2 * 2 * (TQ * C + T * C)
    act_bytes = 4 * (3 * T * C + 6 * TQ * C + 2 * TQ * T + 2 * TQ * 4 * C)
    need = 2 * weight_bytes + tile_bytes + act_bytes + (2 << 20)
    try:
        phys = int(pltpu.get_tpu_info().vmem_capacity_bytes)
    except Exception:
        phys = 64 << 20  # conservative (v7x)
    cap = max(32 << 20, phys - (8 << 20))
    return int(min(max(32 << 20, need), cap))


def gpt2_block(x, params, n_head):
    """params = (ln1g, ln1b, wqkv, bqkv, wap, bap, ln2g, ln2b, wfc, bfc, wmp, bmp)
    with Linear weights pre-transposed to (in_features, out_features)."""
    B, T, C = x.shape
    (ln1g, ln1b, wqkv, bqkv, wap, bap, ln2g, ln2b, wfc, bfc, wmp, bmp) = params

    # shape sanity checks (weights must be (in, out), i.e. pre-transposed)
    assert C % n_head == 0
    assert wqkv.shape == (C, 3 * C) and bqkv.shape == (1, 3 * C)
    assert wap.shape == (C, C) and wfc.shape == (C, 4 * C) and wmp.shape == (4 * C, C)

    # split the fused QKV projection outside the kernel (avoids in-kernel
    # lane-slicing of the weight tile)
    wq, wk, wv = wqkv[:, :C], wqkv[:, C:2 * C], wqkv[:, 2 * C:]
    bq, bk, bv = bqkv[:, :C], bqkv[:, C:2 * C], bqkv[:, 2 * C:]

    TQ = _pick_tq(T)
    num_q = T // TQ

    def whole(shape):
        # constant index_map -> block fetched once, resident for the whole grid
        return pl.BlockSpec(shape, lambda b, qi: (0,) * len(shape))

    in_specs = [
        pl.BlockSpec((1, TQ, C), lambda b, qi: (b, qi, 0)),   # x (query-row tile)
        pl.BlockSpec((1, T, C), lambda b, qi: (b, 0, 0)),     # x (full seq, for K/V)
        whole((1, C)), whole((1, C)),                         # ln1 gamma/beta
        whole((C, C)), whole((1, C)),                         # W_q, b_q
        whole((C, C)), whole((1, C)),                         # W_k, b_k
        whole((C, C)), whole((1, C)),                         # W_v, b_v
        whole((C, C)), whole((1, C)),                         # attn c_proj W, b
        whole((1, C)), whole((1, C)),                         # ln2 gamma/beta
        whole((C, 4 * C)), whole((1, 4 * C)),                 # mlp c_fc W, b
        whole((4 * C, C)), whole((1, C)),                     # mlp c_proj W, b
    ]

    weights = (ln1g, ln1b, wq, bq, wk, bk, wv, bv, wap, bap,
               ln2g, ln2b, wfc, bfc, wmp, bmp)

    return pl.pallas_call(
        functools.partial(block_kernel, n_head=n_head),
        out_shape=jax.ShapeDtypeStruct((B, T, C), x.dtype),
        grid_spec=pltpu.PrefetchScalarGridSpec(
            num_scalar_prefetch=0,
            grid=(B, num_q),
            in_specs=in_specs,
            out_specs=pl.BlockSpec((1, TQ, C), lambda b, qi: (b, qi, 0)),
        ),
        compiler_params=pltpu.CompilerParams(
            dimension_semantics=("parallel", "parallel"),
            vmem_limit_bytes=_vmem_limit_bytes(weights, B, T, TQ, C),
        ),
    )(x, x, *weights)


# ---------------------------- reference (plain JAX) -------------------------
def gpt2_block_ref(x, params, n_head):
    (ln1g, ln1b, wqkv, bqkv, wap, bap, ln2g, ln2b, wfc, bfc, wmp, bmp) = params
    B, T, C = x.shape
    hd = C // n_head

    h1 = _layernorm(x, ln1g, ln1b)
    qkv = h1 @ wqkv + bqkv
    q, k, v = jnp.split(qkv, 3, axis=-1)
    q = q.reshape(B, T, n_head, hd).transpose(0, 2, 1, 3)
    k = k.reshape(B, T, n_head, hd).transpose(0, 2, 1, 3)
    v = v.reshape(B, T, n_head, hd).transpose(0, 2, 1, 3)
    att = jnp.einsum("bhqd,bhkd->bhqk", q, k) / math.sqrt(hd)
    mask = jnp.tril(jnp.ones((T, T), dtype=bool))
    att = jnp.where(mask, att, -jnp.inf)
    att = jax.nn.softmax(att, axis=-1)
    y = jnp.einsum("bhqk,bhkd->bhqd", att, v).transpose(0, 2, 1, 3).reshape(B, T, C)
    x = x + (y @ wap + bap)

    h2 = _layernorm(x, ln2g, ln2b)
    m = _gelu_tanh(h2 @ wfc + bfc) @ wmp + bmp
    return x + m


# -------------------------------- main ---------------------------------------
if __name__ == "__main__":
    B, T, C, n_head = 2, 8, 32, 4     # block_size == T

    key = jax.random.PRNGKey(0)
    keys = jax.random.split(key, 6)

    x = jax.random.normal(keys[0], (B, T, C), dtype=jnp.float32)

    std = 0.02
    ln1g = jnp.ones((1, C), jnp.float32)
    ln1b = jnp.zeros((1, C), jnp.float32)
    wqkv = std * jax.random.normal(keys[1], (C, 3 * C), dtype=jnp.float32)
    bqkv = jnp.zeros((1, 3 * C), jnp.float32)
    wap = std * jax.random.normal(keys[2], (C, C), dtype=jnp.float32)
    bap = jnp.zeros((1, C), jnp.float32)
    ln2g = jnp.ones((1, C), jnp.float32)
    ln2b = jnp.zeros((1, C), jnp.float32)
    wfc = std * jax.random.normal(keys[3], (C, 4 * C), dtype=jnp.float32)
    bfc = jnp.zeros((1, 4 * C), jnp.float32)
    wmp = std * jax.random.normal(keys[4], (4 * C, C), dtype=jnp.float32)
    bmp = jnp.zeros((1, C), jnp.float32)

    params = (ln1g, ln1b, wqkv, bqkv, wap, bap, ln2g, ln2b, wfc, bfc, wmp, bmp)

    # f32 path vs f32 reference (approx reciprocal adds tiny error)
    out = gpt2_block(x, params, n_head)
    out = jax.block_until_ready(out)
    ref = gpt2_block_ref(x, params, n_head)
    assert out.shape == (B, T, C)
    assert jnp.allclose(out, ref, atol=5e-4, rtol=5e-4), "mismatch vs f32 reference"

    # bf16-weight path (recommended perf config); reference uses the same
    # bf16-quantized weights evaluated in f32 math.
    params_bf16 = tuple(p.astype(jnp.bfloat16) for p in params)
    out_bf16 = jax.block_until_ready(gpt2_block(x, params_bf16, n_head))
    ref_bf16 = gpt2_block_ref(
        x, tuple(p.astype(jnp.float32) for p in params_bf16), n_head)
    assert jnp.allclose(out_bf16, ref_bf16, atol=3e-2, rtol=3e-2), \
        "mismatch vs bf16-weight reference"

    print("KERNEL_OK")
</pallas_src>

<mosaic_0001>
module attributes {stable_mosaic.version = 11 : i64} {
  func.func @block_kernel(%arg0: i32, %arg1: i32, %arg2: memref<1x8x32xf32, #tpu.memory_space<vmem>>, %arg3: memref<1x8x32xf32, #tpu.memory_space<vmem>>, %arg4: memref<1x32xf32, #tpu.memory_space<vmem>>, %arg5: memref<1x32xf32, #tpu.memory_space<vmem>>, %arg6: memref<32x32xf32, #tpu.memory_space<vmem>>, %arg7: memref<1x32xf32, #tpu.memory_space<vmem>>, %arg8: memref<32x32xf32, #tpu.memory_space<vmem>>, %arg9: memref<1x32xf32, #tpu.memory_space<vmem>>, %arg10: memref<32x32xf32, #tpu.memory_space<vmem>>, %arg11: memref<1x32xf32, #tpu.memory_space<vmem>>, %arg12: memref<32x32xf32, #tpu.memory_space<vmem>>, %arg13: memref<1x32xf32, #tpu.memory_space<vmem>>, %arg14: memref<1x32xf32, #tpu.memory_space<vmem>>, %arg15: memref<1x32xf32, #tpu.memory_space<vmem>>, %arg16: memref<32x128xf32, #tpu.memory_space<vmem>>, %arg17: memref<1x128xf32, #tpu.memory_space<vmem>>, %arg18: memref<128x32xf32, #tpu.memory_space<vmem>>, %arg19: memref<1x32xf32, #tpu.memory_space<vmem>>, %arg20: memref<1x8x32xf32, #tpu.memory_space<vmem>>) attributes {dimension_semantics = [#tpu.dimension_semantics<parallel>, #tpu.dimension_semantics<parallel>], iteration_bounds = array<i64: 2, 1>, scalar_prefetch = 0 : i64, scratch_operands = 0 : i64, tpu.core_type = #tpu.core_type<tc>, window_params = [{transform_indices = @transform_0, window_bounds = array<i64: 1, 8, 32>}, {transform_indices = @transform_1, window_bounds = array<i64: 1, 8, 32>}, {pipeline_mode = #tpu.pipeline_mode<synchronous>, transform_indices = @transform_2, window_bounds = array<i64: 1, 32>}, {pipeline_mode = #tpu.pipeline_mode<synchronous>, transform_indices = @transform_3, window_bounds = array<i64: 1, 32>}, {pipeline_mode = #tpu.pipeline_mode<synchronous>, transform_indices = @transform_4, window_bounds = array<i64: 32, 32>}, {pipeline_mode = #tpu.pipeline_mode<synchronous>, transform_indices = @transform_5, window_bounds = array<i64: 1, 32>}, {pipeline_mode = #tpu.pipeline_mode<synchronous>, transform_indices = @transform_6, window_bounds = array<i64: 32, 32>}, {pipeline_mode = #tpu.pipeline_mode<synchronous>, transform_indices = @transform_7, window_bounds = array<i64: 1, 32>}, {pipeline_mode = #tpu.pipeline_mode<synchronous>, transform_indices = @transform_8, window_bounds = array<i64: 32, 32>}, {pipeline_mode = #tpu.pipeline_mode<synchronous>, transform_indices = @transform_9, window_bounds = array<i64: 1, 32>}, {pipeline_mode = #tpu.pipeline_mode<synchronous>, transform_indices = @transform_10, window_bounds = array<i64: 32, 32>}, {pipeline_mode = #tpu.pipeline_mode<synchronous>, transform_indices = @transform_11, window_bounds = array<i64: 1, 32>}, {pipeline_mode = #tpu.pipeline_mode<synchronous>, transform_indices = @transform_12, window_bounds = array<i64: 1, 32>}, {pipeline_mode = #tpu.pipeline_mode<synchronous>, transform_indices = @transform_13, window_bounds = array<i64: 1, 32>}, {pipeline_mode = #tpu.pipeline_mode<synchronous>, transform_indices = @transform_14, window_bounds = array<i64: 32, 128>}, {pipeline_mode = #tpu.pipeline_mode<synchronous>, transform_indices = @transform_15, window_bounds = array<i64: 1, 128>}, {pipeline_mode = #tpu.pipeline_mode<synchronous>, transform_indices = @transform_16, window_bounds = array<i64: 128, 32>}, {pipeline_mode = #tpu.pipeline_mode<synchronous>, transform_indices = @transform_17, window_bounds = array<i64: 1, 32>}, {transform_indices = @transform_18, window_bounds = array<i64: 1, 8, 32>}]} {
    %c0 = arith.constant 0 : index
    %c0_0 = arith.constant 0 : index
    %c0_1 = arith.constant 0 : index
    %0 = vector.load %arg2[%c0, %c0_0, %c0_1] : memref<1x8x32xf32, #tpu.memory_space<vmem>>, vector<1x8x32xf32>
    %1 = vector.shape_cast %0 : vector<1x8x32xf32> to vector<8x32xf32>
    %c0_2 = arith.constant 0 : index
    %c0_3 = arith.constant 0 : index
    %c0_4 = arith.constant 0 : index
    %2 = vector.load %arg3[%c0_2, %c0_3, %c0_4] : memref<1x8x32xf32, #tpu.memory_space<vmem>>, vector<1x8x32xf32>
    %3 = vector.shape_cast %2 : vector<1x8x32xf32> to vector<8x32xf32>
    %c0_5 = arith.constant 0 : index
    %c0_6 = arith.constant 0 : index
    %4 = vector.load %arg4[%c0_5, %c0_6] : memref<1x32xf32, #tpu.memory_space<vmem>>, vector<1x32xf32>
    %c0_7 = arith.constant 0 : index
    %c0_8 = arith.constant 0 : index
    %5 = vector.load %arg5[%c0_7, %c0_8] : memref<1x32xf32, #tpu.memory_space<vmem>>, vector<1x32xf32>
    %cst = arith.constant dense<0.000000e+00> : vector<8xf32>
    %6 = vector.multi_reduction <add>, %1, %cst [1] : vector<8x32xf32> to vector<8xf32>
    %7 = vector.shape_cast %6 : vector<8xf32> to vector<8x1xf32>
    %cst_9 = arith.constant 3.200000e+01 : f32
    %8 = vector.broadcast %cst_9 : f32 to vector<8x1xf32>
    %9 = arith.divf %7, %8 : vector<8x1xf32>
    %10 = vector.broadcast %9 : vector<8x1xf32> to vector<8x32xf32>
    %11 = arith.subf %1, %10 : vector<8x32xf32>
    %12 = arith.mulf %11, %11 : vector<8x32xf32>
    %cst_10 = arith.constant dense<0.000000e+00> : vector<8xf32>
    %13 = vector.multi_reduction <add>, %12, %cst_10 [1] : vector<8x32xf32> to vector<8xf32>
    %14 = vector.shape_cast %13 : vector<8xf32> to vector<8x1xf32>
    %cst_11 = arith.constant 3.200000e+01 : f32
    %15 = vector.broadcast %cst_11 : f32 to vector<8x1xf32>
    %16 = arith.divf %14, %15 : vector<8x1xf32>
    %17 = vector.broadcast %9 : vector<8x1xf32> to vector<8x32xf32>
    %18 = arith.subf %1, %17 : vector<8x32xf32>
    %cst_12 = arith.constant 9.99999974E-6 : f32
    %19 = vector.broadcast %cst_12 : f32 to vector<8x1xf32>
    %20 = arith.addf %16, %19 : vector<8x1xf32>
    %21 = math.rsqrt %20 : vector<8x1xf32>
    %22 = vector.broadcast %21 : vector<8x1xf32> to vector<8x32xf32>
    %23 = arith.mulf %18, %22 : vector<8x32xf32>
    %24 = vector.broadcast %4 : vector<1x32xf32> to vector<8x32xf32>
    %25 = arith.mulf %23, %24 : vector<8x32xf32>
    %26 = vector.broadcast %5 : vector<1x32xf32> to vector<8x32xf32>
    %27 = arith.addf %25, %26 : vector<8x32xf32>
    %cst_13 = arith.constant dense<0.000000e+00> : vector<8xf32>
    %28 = vector.multi_reduction <add>, %3, %cst_13 [1] : vector<8x32xf32> to vector<8xf32>
    %29 = vector.shape_cast %28 : vector<8xf32> to vector<8x1xf32>
    %cst_14 = arith.constant 3.200000e+01 : f32
    %30 = vector.broadcast %cst_14 : f32 to vector<8x1xf32>
    %31 = arith.divf %29, %30 : vector<8x1xf32>
    %32 = vector.broadcast %31 : vector<8x1xf32> to vector<8x32xf32>
    %33 = arith.subf %3, %32 : vector<8x32xf32>
    %34 = arith.mulf %33, %33 : vector<8x32xf32>
    %cst_15 = arith.constant dense<0.000000e+00> : vector<8xf32>
    %35 = vector.multi_reduction <add>, %34, %cst_15 [1] : vector<8x32xf32> to vector<8xf32>
    %36 = vector.shape_cast %35 : vector<8xf32> to vector<8x1xf32>
    %cst_16 = arith.constant 3.200000e+01 : f32
    %37 = vector.broadcast %cst_16 : f32 to vector<8x1xf32>
    %38 = arith.divf %36, %37 : vector<8x1xf32>
    %39 = vector.broadcast %31 : vector<8x1xf32> to vector<8x32xf32>
    %40 = arith.subf %3, %39 : vector<8x32xf32>
    %cst_17 = arith.constant 9.99999974E-6 : f32
    %41 = vector.broadcast %cst_17 : f32 to vector<8x1xf32>
    %42 = arith.addf %38, %41 : vector<8x1xf32>
    %43 = math.rsqrt %42 : vector<8x1xf32>
    %44 = vector.broadcast %43 : vector<8x1xf32> to vector<8x32xf32>
    %45 = arith.mulf %40, %44 : vector<8x32xf32>
    %46 = vector.broadcast %4 : vector<1x32xf32> to vector<8x32xf32>
    %47 = arith.mulf %45, %46 : vector<8x32xf32>
    %48 = vector.broadcast %5 : vector<1x32xf32> to vector<8x32xf32>
    %49 = arith.addf %47, %48 : vector<8x32xf32>
    %c0_18 = arith.constant 0 : index
    %c0_19 = arith.constant 0 : index
    %50 = vector.load %arg6[%c0_18, %c0_19] : memref<32x32xf32, #tpu.memory_space<vmem>>, vector<32x32xf32>
    %cst_20 = arith.constant dense<0.000000e+00> : vector<8x32xf32>
    %51 = tpu.matmul %27, %50, %cst_20 {dimension_numbers = #tpu.dot_dimension_numbers<[1], [0], [0], [1], [0, 0, 1, 1], [], []>} : vector<8x32xf32>, vector<32x32xf32>, vector<8x32xf32> -> vector<8x32xf32>
    %c0_21 = arith.constant 0 : index
    %c0_22 = arith.constant 0 : index
    %52 = vector.load %arg7[%c0_21, %c0_22] : memref<1x32xf32, #tpu.memory_space<vmem>>, vector<1x32xf32>
    %53 = vector.broadcast %52 : vector<1x32xf32> to vector<8x32xf32>
    %54 = arith.addf %51, %53 : vector<8x32xf32>
    %c0_23 = arith.constant 0 : index
    %c0_24 = arith.constant 0 : index
    %55 = vector.load %arg8[%c0_23, %c0_24] : memref<32x32xf32, #tpu.memory_space<vmem>>, vector<32x32xf32>
    %cst_25 = arith.constant dense<0.000000e+00> : vector<8x32xf32>
    %56 = tpu.matmul %49, %55, %cst_25 {dimension_numbers = #tpu.dot_dimension_numbers<[1], [0], [0], [1], [0, 0, 1, 1], [], []>} : vector<8x32xf32>, vector<32x32xf32>, vector<8x32xf32> -> vector<8x32xf32>
    %c0_26 = arith.constant 0 : index
    %c0_27 = arith.constant 0 : index
    %57 = vector.load %arg9[%c0_26, %c0_27] : memref<1x32xf32, #tpu.memory_space<vmem>>, vector<1x32xf32>
    %58 = vector.broadcast %57 : vector<1x32xf32> to vector<8x32xf32>
    %59 = arith.addf %56, %58 : vector<8x32xf32>
    %c0_28 = arith.constant 0 : index
    %c0_29 = arith.constant 0 : index
    %60 = vector.load %arg10[%c0_28, %c0_29] : memref<32x32xf32, #tpu.memory_space<vmem>>, vector<32x32xf32>
    %cst_30 = arith.constant dense<0.000000e+00> : vector<8x32xf32>
    %61 = tpu.matmul %49, %60, %cst_30 {dimension_numbers = #tpu.dot_dimension_numbers<[1], [0], [0], [1], [0, 0, 1, 1], [], []>} : vector<8x32xf32>, vector<32x32xf32>, vector<8x32xf32> -> vector<8x32xf32>
    %c0_31 = arith.constant 0 : index
    %c0_32 = arith.constant 0 : index
    %62 = vector.load %arg11[%c0_31, %c0_32] : memref<1x32xf32, #tpu.memory_space<vmem>>, vector<1x32xf32>
    %63 = vector.broadcast %62 : vector<1x32xf32> to vector<8x32xf32>
    %64 = arith.addf %61, %63 : vector<8x32xf32>
    %c8_i32 = arith.constant 8 : i32
    %65 = arith.muli %arg1, %c8_i32 : i32
    %66 = tpu.iota {dimensions = array<i32: 0>} : vector<8x8xi32>
    %67 = vector.broadcast %65 : i32 to vector<8x8xi32>
    %68 = arith.addi %67, %66 : vector<8x8xi32>
    %69 = tpu.iota {dimensions = array<i32: 1>} : vector<8x8xi32>
    %70 = arith.cmpi sle, %69, %68 : vector<8x8xi32>
    %cst_33 = arith.constant 0.000000e+00 : f32
    %71 = vector.broadcast %cst_33 : f32 to vector<8x32xf32>
    %72 = vector.extract_strided_slice %54 {offsets = [0, 0], sizes = [8, 8], strides = [1, 1]} : vector<8x32xf32> to vector<8x8xf32>
    %73 = vector.extract_strided_slice %59 {offsets = [0, 0], sizes = [8, 8], strides = [1, 1]} : vector<8x32xf32> to vector<8x8xf32>
    %74 = vector.extract_strided_slice %64 {offsets = [0, 0], sizes = [8, 8], strides = [1, 1]} : vector<8x32xf32> to vector<8x8xf32>
    %cst_34 = arith.constant dense<0.000000e+00> : vector<8x8xf32>
    %75 = tpu.matmul %72, %73, %cst_34 {dimension_numbers = #tpu.dot_dimension_numbers<[1], [1], [0], [0], [0, 0, 1, 0], [], []>} : vector<8x8xf32>, vector<8x8xf32>, vector<8x8xf32> -> vector<8x8xf32>
    %cst_35 = arith.constant 0.353553385 : f32
    %76 = vector.broadcast %cst_35 : f32 to vector<8x8xf32>
    %77 = arith.mulf %75, %76 : vector<8x8xf32>
    %cst_36 = arith.constant -1.000000e+30 : f32
    %78 = vector.broadcast %cst_36 : f32 to vector<8x8xf32>
    %79 = arith.select %70, %77, %78 : vector<8x8xi1>, vector<8x8xf32>
    %cst_37 = arith.constant dense<0xFF800000> : vector<8xf32>
    %80 = vector.multi_reduction <maximumf>, %79, %cst_37 [1] : vector<8x8xf32> to vector<8xf32>
    %81 = vector.shape_cast %80 : vector<8xf32> to vector<8x1xf32>
    %82 = vector.broadcast %81 : vector<8x1xf32> to vector<8x8xf32>
    %83 = arith.subf %79, %82 : vector<8x8xf32>
    %84 = math.exp %83 : vector<8x8xf32>
    %cst_38 = arith.constant dense<0.000000e+00> : vector<8xf32>
    %85 = vector.multi_reduction <add>, %84, %cst_38 [1] : vector<8x8xf32> to vector<8xf32>
    %86 = vector.shape_cast %85 : vector<8xf32> to vector<8x1xf32>
    %87 = tpu.reciprocal %86 {approx = true} : vector<8x1xf32> -> vector<8x1xf32>
    %88 = vector.broadcast %87 : vector<8x1xf32> to vector<8x8xf32>
    %89 = arith.mulf %84, %88 : vector<8x8xf32>
    %cst_39 = arith.constant dense<0.000000e+00> : vector<8x8xf32>
    %90 = tpu.matmul %89, %74, %cst_39 {dimension_numbers = #tpu.dot_dimension_numbers<[1], [0], [0], [1], [0, 0, 1, 1], [], []>} : vector<8x8xf32>, vector<8x8xf32>, vector<8x8xf32> -> vector<8x8xf32>
    %c0_40 = arith.constant 0 : index
    %c0_41 = arith.constant 0 : index
    %91 = vector.load %arg12[%c0_40, %c0_41] : memref<32x32xf32, #tpu.memory_space<vmem>>, vector<8x32xf32>
    %cst_42 = arith.constant dense<0.000000e+00> : vector<8x32xf32>
    %92 = tpu.matmul %90, %91, %cst_42 {dimension_numbers = #tpu.dot_dimension_numbers<[1], [0], [0], [1], [0, 0, 1, 1], [], []>} : vector<8x8xf32>, vector<8x32xf32>, vector<8x32xf32> -> vector<8x32xf32>
    %93 = arith.addf %71, %92 : vector<8x32xf32>
    %94 = vector.extract_strided_slice %54 {offsets = [0, 8], sizes = [8, 8], strides = [1, 1]} : vector<8x32xf32> to vector<8x8xf32>
    %95 = vector.extract_strided_slice %59 {offsets = [0, 8], sizes = [8, 8], strides = [1, 1]} : vector<8x32xf32> to vector<8x8xf32>
    %96 = vector.extract_strided_slice %64 {offsets = [0, 8], sizes = [8, 8], strides = [1, 1]} : vector<8x32xf32> to vector<8x8xf32>
    %cst_43 = arith.constant dense<0.000000e+00> : vector<8x8xf32>
    %97 = tpu.matmul %94, %95, %cst_43 {dimension_numbers = #tpu.dot_dimension_numbers<[1], [1], [0], [0], [0, 0, 1, 0], [], []>} : vector<8x8xf32>, vector<8x8xf32>, vector<8x8xf32> -> vector<8x8xf32>
    %cst_44 = arith.constant 0.353553385 : f32
    %98 = vector.broadcast %cst_44 : f32 to vector<8x8xf32>
    %99 = arith.mulf %97, %98 : vector<8x8xf32>
    %cst_45 = arith.constant -1.000000e+30 : f32
    %100 = vector.broadcast %cst_45 : f32 to vector<8x8xf32>
    %101 = arith.select %70, %99, %100 : vector<8x8xi1>, vector<8x8xf32>
    %cst_46 = arith.constant dense<0xFF800000> : vector<8xf32>
    %102 = vector.multi_reduction <maximumf>, %101, %cst_46 [1] : vector<8x8xf32> to vector<8xf32>
    %103 = vector.shape_cast %102 : vector<8xf32> to vector<8x1xf32>
    %104 = vector.broadcast %103 : vector<8x1xf32> to vector<8x8xf32>
    %105 = arith.subf %101, %104 : vector<8x8xf32>
    %106 = math.exp %105 : vector<8x8xf32>
    %cst_47 = arith.constant dense<0.000000e+00> : vector<8xf32>
    %107 = vector.multi_reduction <add>, %106, %cst_47 [1] : vector<8x8xf32> to vector<8xf32>
    %108 = vector.shape_cast %107 : vector<8xf32> to vector<8x1xf32>
    %109 = tpu.reciprocal %108 {approx = true} : vector<8x1xf32> -> vector<8x1xf32>
    %110 = vector.broadcast %109 : vector<8x1xf32> to vector<8x8xf32>
    %111 = arith.mulf %106, %110 : vector<8x8xf32>
    %cst_48 = arith.constant dense<0.000000e+00> : vector<8x8xf32>
    %112 = tpu.matmul %111, %96, %cst_48 {dimension_numbers = #tpu.dot_dimension_numbers<[1], [0], [0], [1], [0, 0, 1, 1], [], []>} : vector<8x8xf32>, vector<8x8xf32>, vector<8x8xf32> -> vector<8x8xf32>
    %c8 = arith.constant 8 : index
    %c0_49 = arith.constant 0 : index
    %113 = vector.load %arg12[%c8, %c0_49] : memref<32x32xf32, #tpu.memory_space<vmem>>, vector<8x32xf32>
    %cst_50 = arith.constant dense<0.000000e+00> : vector<8x32xf32>
    %114 = tpu.matmul %112, %113, %cst_50 {dimension_numbers = #tpu.dot_dimension_numbers<[1], [0], [0], [1], [0, 0, 1, 1], [], []>} : vector<8x8xf32>, vector<8x32xf32>, vector<8x32xf32> -> vector<8x32xf32>
    %115 = arith.addf %93, %114 : vector<8x32xf32>
    %116 = vector.extract_strided_slice %54 {offsets = [0, 16], sizes = [8, 8], strides = [1, 1]} : vector<8x32xf32> to vector<8x8xf32>
    %117 = vector.extract_strided_slice %59 {offsets = [0, 16], sizes = [8, 8], strides = [1, 1]} : vector<8x32xf32> to vector<8x8xf32>
    %118 = vector.extract_strided_slice %64 {offsets = [0, 16], sizes = [8, 8], strides = [1, 1]} : vector<8x32xf32> to vector<8x8xf32>
    %cst_51 = arith.constant dense<0.000000e+00> : vector<8x8xf32>
    %119 = tpu.matmul %116, %117, %cst_51 {dimension_numbers = #tpu.dot_dimension_numbers<[1], [1], [0], [0], [0, 0, 1, 0], [], []>} : vector<8x8xf32>, vector<8x8xf32>, vector<8x8xf32> -> vector<8x8xf32>
    %cst_52 = arith.constant 0.353553385 : f32
    %120 = vector.broadcast %cst_52 : f32 to vector<8x8xf32>
    %121 = arith.mulf %119, %120 : vector<8x8xf32>
    %cst_53 = arith.constant -1.000000e+30 : f32
    %122 = vector.broadcast %cst_53 : f32 to vector<8x8xf32>
    %123 = arith.select %70, %121, %122 : vector<8x8xi1>, vector<8x8xf32>
    %cst_54 = arith.constant dense<0xFF800000> : vector<8xf32>
    %124 = vector.multi_reduction <maximumf>, %123, %cst_54 [1] : vector<8x8xf32> to vector<8xf32>
    %125 = vector.shape_cast %124 : vector<8xf32> to vector<8x1xf32>
    %126 = vector.broadcast %125 : vector<8x1xf32> to vector<8x8xf32>
    %127 = arith.subf %123, %126 : vector<8x8xf32>
    %128 = math.exp %127 : vector<8x8xf32>
    %cst_55 = arith.constant dense<0.000000e+00> : vector<8xf32>
    %129 = vector.multi_reduction <add>, %128, %cst_55 [1] : vector<8x8xf32> to vector<8xf32>
    %130 = vector.shape_cast %129 : vector<8xf32> to vector<8x1xf32>
    %131 = tpu.reciprocal %130 {approx = true} : vector<8x1xf32> -> vector<8x1xf32>
    %132 = vector.broadcast %131 : vector<8x1xf32> to vector<8x8xf32>
    %133 = arith.mulf %128, %132 : vector<8x8xf32>
    %cst_56 = arith.constant dense<0.000000e+00> : vector<8x8xf32>
    %134 = tpu.matmul %133, %118, %cst_56 {dimension_numbers = #tpu.dot_dimension_numbers<[1], [0], [0], [1], [0, 0, 1, 1], [], []>} : vector<8x8xf32>, vector<8x8xf32>, vector<8x8xf32> -> vector<8x8xf32>
    %c16 = arith.constant 16 : index
    %c0_57 = arith.constant 0 : index
    %135 = vector.load %arg12[%c16, %c0_57] : memref<32x32xf32, #tpu.memory_space<vmem>>, vector<8x32xf32>
    %cst_58 = arith.constant dense<0.000000e+00> : vector<8x32xf32>
    %136 = tpu.matmul %134, %135, %cst_58 {dimension_numbers = #tpu.dot_dimension_numbers<[1], [0], [0], [1], [0, 0, 1, 1], [], []>} : vector<8x8xf32>, vector<8x32xf32>, vector<8x32xf32> -> vector<8x32xf32>
    %137 = arith.addf %115, %136 : vector<8x32xf32>
    %138 = vector.extract_strided_slice %54 {offsets = [0, 24], sizes = [8, 8], strides = [1, 1]} : vector<8x32xf32> to vector<8x8xf32>
    %139 = vector.extract_strided_slice %59 {offsets = [0, 24], sizes = [8, 8], strides = [1, 1]} : vector<8x32xf32> to vector<8x8xf32>
    %140 = vector.extract_strided_slice %64 {offsets = [0, 24], sizes = [8, 8], strides = [1, 1]} : vector<8x32xf32> to vector<8x8xf32>
    %cst_59 = arith.constant dense<0.000000e+00> : vector<8x8xf32>
    %141 = tpu.matmul %138, %139, %cst_59 {dimension_numbers = #tpu.dot_dimension_numbers<[1], [1], [0], [0], [0, 0, 1, 0], [], []>} : vector<8x8xf32>, vector<8x8xf32>, vector<8x8xf32> -> vector<8x8xf32>
    %cst_60 = arith.constant 0.353553385 : f32
    %142 = vector.broadcast %cst_60 : f32 to vector<8x8xf32>
    %143 = arith.mulf %141, %142 : vector<8x8xf32>
    %cst_61 = arith.constant -1.000000e+30 : f32
    %144 = vector.broadcast %cst_61 : f32 to vector<8x8xf32>
    %145 = arith.select %70, %143, %144 : vector<8x8xi1>, vector<8x8xf32>
    %cst_62 = arith.constant dense<0xFF800000> : vector<8xf32>
    %146 = vector.multi_reduction <maximumf>, %145, %cst_62 [1] : vector<8x8xf32> to vector<8xf32>
    %147 = vector.shape_cast %146 : vector<8xf32> to vector<8x1xf32>
    %148 = vector.broadcast %147 : vector<8x1xf32> to vector<8x8xf32>
    %149 = arith.subf %145, %148 : vector<8x8xf32>
    %150 = math.exp %149 : vector<8x8xf32>
    %cst_63 = arith.constant dense<0.000000e+00> : vector<8xf32>
    %151 = vector.multi_reduction <add>, %150, %cst_63 [1] : vector<8x8xf32> to vector<8xf32>
    %152 = vector.shape_cast %151 : vector<8xf32> to vector<8x1xf32>
    %153 = tpu.reciprocal %152 {approx = true} : vector<8x1xf32> -> vector<8x1xf32>
    %154 = vector.broadcast %153 : vector<8x1xf32> to vector<8x8xf32>
    %155 = arith.mulf %150, %154 : vector<8x8xf32>
    %cst_64 = arith.constant dense<0.000000e+00> : vector<8x8xf32>
    %156 = tpu.matmul %155, %140, %cst_64 {dimension_numbers = #tpu.dot_dimension_numbers<[1], [0], [0], [1], [0, 0, 1, 1], [], []>} : vector<8x8xf32>, vector<8x8xf32>, vector<8x8xf32> -> vector<8x8xf32>
    %c24 = arith.constant 24 : index
    %c0_65 = arith.constant 0 : index
    %157 = vector.load %arg12[%c24, %c0_65] : memref<32x32xf32, #tpu.memory_space<vmem>>, vector<8x32xf32>
    %cst_66 = arith.constant dense<0.000000e+00> : vector<8x32xf32>
    %158 = tpu.matmul %156, %157, %cst_66 {dimension_numbers = #tpu.dot_dimension_numbers<[1], [0], [0], [1], [0, 0, 1, 1], [], []>} : vector<8x8xf32>, vector<8x32xf32>, vector<8x32xf32> -> vector<8x32xf32>
    %159 = arith.addf %137, %158 : vector<8x32xf32>
    %c0_67 = arith.constant 0 : index
    %c0_68 = arith.constant 0 : index
    %160 = vector.load %arg13[%c0_67, %c0_68] : memref<1x32xf32, #tpu.memory_space<vmem>>, vector<1x32xf32>
    %161 = vector.broadcast %160 : vector<1x32xf32> to vector<8x32xf32>
    %162 = arith.addf %159, %161 : vector<8x32xf32>
    %163 = arith.addf %1, %162 : vector<8x32xf32>
    %c0_69 = arith.constant 0 : index
    %c0_70 = arith.constant 0 : index
    %164 = vector.load %arg14[%c0_69, %c0_70] : memref<1x32xf32, #tpu.memory_space<vmem>>, vector<1x32xf32>
    %c0_71 = arith.constant 0 : index
    %c0_72 = arith.constant 0 : index
    %165 = vector.load %arg15[%c0_71, %c0_72] : memref<1x32xf32, #tpu.memory_space<vmem>>, vector<1x32xf32>
    %cst_73 = arith.constant dense<0.000000e+00> : vector<8xf32>
    %166 = vector.multi_reduction <add>, %163, %cst_73 [1] : vector<8x32xf32> to vector<8xf32>
    %167 = vector.shape_cast %166 : vector<8xf32> to vector<8x1xf32>
    %cst_74 = arith.constant 3.200000e+01 : f32
    %168 = vector.broadcast %cst_74 : f32 to vector<8x1xf32>
    %169 = arith.divf %167, %168 : vector<8x1xf32>
    %170 = vector.broadcast %169 : vector<8x1xf32> to vector<8x32xf32>
    %171 = arith.subf %163, %170 : vector<8x32xf32>
    %172 = arith.mulf %171, %171 : vector<8x32xf32>
    %cst_75 = arith.constant dense<0.000000e+00> : vector<8xf32>
    %173 = vector.multi_reduction <add>, %172, %cst_75 [1] : vector<8x32xf32> to vector<8xf32>
    %174 = vector.shape_cast %173 : vector<8xf32> to vector<8x1xf32>
    %cst_76 = arith.constant 3.200000e+01 : f32
    %175 = vector.broadcast %cst_76 : f32 to vector<8x1xf32>
    %176 = arith.divf %174, %175 : vector<8x1xf32>
    %177 = vector.broadcast %169 : vector<8x1xf32> to vector<8x32xf32>
    %178 = arith.subf %163, %177 : vector<8x32xf32>
    %cst_77 = arith.constant 9.99999974E-6 : f32
    %179 = vector.broadcast %cst_77 : f32 to vector<8x1xf32>
    %180 = arith.addf %176, %179 : vector<8x1xf32>
    %181 = math.rsqrt %180 : vector<8x1xf32>
    %182 = vector.broadcast %181 : vector<8x1xf32> to vector<8x32xf32>
    %183 = arith.mulf %178, %182 : vector<8x32xf32>
    %184 = vector.broadcast %164 : vector<1x32xf32> to vector<8x32xf32>
    %185 = arith.mulf %183, %184 : vector<8x32xf32>
    %186 = vector.broadcast %165 : vector<1x32xf32> to vector<8x32xf32>
    %187 = arith.addf %185, %186 : vector<8x32xf32>
    %c0_78 = arith.constant 0 : index
    %c0_79 = arith.constant 0 : index
    %188 = vector.load %arg16[%c0_78, %c0_79] : memref<32x128xf32, #tpu.memory_space<vmem>>, vector<32x128xf32>
    %cst_80 = arith.constant dense<0.000000e+00> : vector<8x128xf32>
    %189 = tpu.matmul %187, %188, %cst_80 {dimension_numbers = #tpu.dot_dimension_numbers<[1], [0], [0], [1], [0, 0, 1, 1], [], []>} : vector<8x32xf32>, vector<32x128xf32>, vector<8x128xf32> -> vector<8x128xf32>
    %c0_81 = arith.constant 0 : index
    %c0_82 = arith.constant 0 : index
    %190 = vector.load %arg17[%c0_81, %c0_82] : memref<1x128xf32, #tpu.memory_space<vmem>>, vector<1x128xf32>
    %191 = vector.broadcast %190 : vector<1x128xf32> to vector<8x128xf32>
    %192 = arith.addf %189, %191 : vector<8x128xf32>
    %cst_83 = arith.constant 5.000000e-01 : f32
    %193 = vector.broadcast %cst_83 : f32 to vector<8x128xf32>
    %194 = arith.mulf %193, %192 : vector<8x128xf32>
    %cst_84 = arith.constant 4.471500e-02 : f32
    %195 = vector.broadcast %cst_84 : f32 to vector<8x128xf32>
    %196 = arith.mulf %195, %192 : vector<8x128xf32>
    %197 = arith.mulf %196, %192 : vector<8x128xf32>
    %198 = arith.mulf %197, %192 : vector<8x128xf32>
    %199 = arith.addf %192, %198 : vector<8x128xf32>
    %cst_85 = arith.constant 0.797884583 : f32
    %200 = vector.broadcast %cst_85 : f32 to vector<8x128xf32>
    %201 = arith.mulf %200, %199 : vector<8x128xf32>
    %202 = math.tanh %201 : vector<8x128xf32>
    %cst_86 = arith.constant 1.000000e+00 : f32
    %203 = vector.broadcast %cst_86 : f32 to vector<8x128xf32>
    %204 = arith.addf %203, %202 : vector<8x128xf32>
    %205 = arith.mulf %194, %204 : vector<8x128xf32>
    %c0_87 = arith.constant 0 : index
    %c0_88 = arith.constant 0 : index
    %206 = vector.load %arg18[%c0_87, %c0_88] : memref<128x32xf32, #tpu.memory_space<vmem>>, vector<128x32xf32>
    %cst_89 = arith.constant dense<0.000000e+00> : vector<8x32xf32>
    %207 = tpu.matmul %205, %206, %cst_89 {dimension_numbers = #tpu.dot_dimension_numbers<[1], [0], [0], [1], [0, 0, 1, 1], [], []>} : vector<8x128xf32>, vector<128x32xf32>, vector<8x32xf32> -> vector<8x32xf32>
    %c0_90 = arith.constant 0 : index
    %c0_91 = arith.constant 0 : index
    %208 = vector.load %arg19[%c0_90, %c0_91] : memref<1x32xf32, #tpu.memory_space<vmem>>, vector<1x32xf32>
    %209 = vector.broadcast %208 : vector<1x32xf32> to vector<8x32xf32>
    %210 = arith.addf %207, %209 : vector<8x32xf32>
    %211 = arith.addf %163, %210 : vector<8x32xf32>
    %c0_92 = arith.constant 0 : index
    %c0_93 = arith.constant 0 : index
    %c0_94 = arith.constant 0 : index
    %212 = vector.load %arg20[%c0_92, %c0_93, %c0_94] : memref<1x8x32xf32, #tpu.memory_space<vmem>>, vector<1x8x32xf32>
    %213 = vector.shape_cast %212 : vector<1x8x32xf32> to vector<8x32xf32>
    %214 = vector.shape_cast %211 : vector<8x32xf32> to vector<1x8x32xf32>
    tpu.vector_store %arg20[%c0_92, %c0_93, %c0_94], %214 {strides = array<i32>} : memref<1x8x32xf32, #tpu.memory_space<vmem>>, vector<1x8x32xf32>,
    return
  }
  func.func @transform_0(%arg0: i32, %arg1: i32) -> (i32, i32, i32) {
    %c0_i32 = arith.constant 0 : i32
    %c0_i32_0 = arith.constant 0 : i32
    return %arg0, %arg1, %c0_i32 : i32, i32, i32
  }
  func.func @transform_1(%arg0: i32, %arg1: i32) -> (i32, i32, i32) {
    %c0_i32 = arith.constant 0 : i32
    %c0_i32_0 = arith.constant 0 : i32
    %c0_i32_1 = arith.constant 0 : i32
    return %arg0, %c0_i32, %c0_i32_0 : i32, i32, i32
  }
  func.func @transform_2(%arg0: i32, %arg1: i32) -> (i32, i32) {
    %c0_i32 = arith.constant 0 : i32
    %c0_i32_0 = arith.constant 0 : i32
    %c0_i32_1 = arith.constant 0 : i32
    return %c0_i32, %c0_i32_0 : i32, i32
  }
  func.func @transform_3(%arg0: i32, %arg1: i32) -> (i32, i32) {
    %c0_i32 = arith.constant 0 : i32
    %c0_i32_0 = arith.constant 0 : i32
    %c0_i32_1 = arith.constant 0 : i32
    return %c0_i32, %c0_i32_0 : i32, i32
  }
  func.func @transform_4(%arg0: i32, %arg1: i32) -> (i32, i32) {
    %c0_i32 = arith.constant 0 : i32
    %c0_i32_0 = arith.constant 0 : i32
    %c0_i32_1 = arith.constant 0 : i32
    return %c0_i32, %c0_i32_0 : i32, i32
  }
  func.func @transform_5(%arg0: i32, %arg1: i32) -> (i32, i32) {
    %c0_i32 = arith.constant 0 : i32
    %c0_i32_0 = arith.constant 0 : i32
    %c0_i32_1 = arith.constant 0 : i32
    return %c0_i32, %c0_i32_0 : i32, i32
  }
  func.func @transform_6(%arg0: i32, %arg1: i32) -> (i32, i32) {
    %c0_i32 = arith.constant 0 : i32
    %c0_i32_0 = arith.constant 0 : i32
    %c0_i32_1 = arith.constant 0 : i32
    return %c0_i32, %c0_i32_0 : i32, i32
  }
  func.func @transform_7(%arg0: i32, %arg1: i32) -> (i32, i32) {
    %c0_i32 = arith.constant 0 : i32
    %c0_i32_0 = arith.constant 0 : i32
    %c0_i32_1 = arith.constant 0 : i32
    return %c0_i32, %c0_i32_0 : i32, i32
  }
  func.func @transform_8(%arg0: i32, %arg1: i32) -> (i32, i32) {
    %c0_i32 = arith.constant 0 : i32
    %c0_i32_0 = arith.constant 0 : i32
    %c0_i32_1 = arith.constant 0 : i32
    return %c0_i32, %c0_i32_0 : i32, i32
  }
  func.func @transform_9(%arg0: i32, %arg1: i32) -> (i32, i32) {
    %c0_i32 = arith.constant 0 : i32
    %c0_i32_0 = arith.constant 0 : i32
    %c0_i32_1 = arith.constant 0 : i32
    return %c0_i32, %c0_i32_0 : i32, i32
  }
  func.func @transform_10(%arg0: i32, %arg1: i32) -> (i32, i32) {
    %c0_i32 = arith.constant 0 : i32
    %c0_i32_0 = arith.constant 0 : i32
    %c0_i32_1 = arith.constant 0 : i32
    return %c0_i32, %c0_i32_0 : i32, i32
  }
  func.func @transform_11(%arg0: i32, %arg1: i32) -> (i32, i32) {
    %c0_i32 = arith.constant 0 : i32
    %c0_i32_0 = arith.constant 0 : i32
    %c0_i32_1 = arith.constant 0 : i32
    return %c0_i32, %c0_i32_0 : i32, i32
  }
  func.func @transform_12(%arg0: i32, %arg1: i32) -> (i32, i32) {
    %c0_i32 = arith.constant 0 : i32
    %c0_i32_0 = arith.constant 0 : i32
    %c0_i32_1 = arith.constant 0 : i32
    return %c0_i32, %c0_i32_0 : i32, i32
  }
  func.func @transform_13(%arg0: i32, %arg1: i32) -> (i32, i32) {
    %c0_i32 = arith.constant 0 : i32
    %c0_i32_0 = arith.constant 0 : i32
    %c0_i32_1 = arith.constant 0 : i32
    return %c0_i32, %c0_i32_0 : i32, i32
  }
  func.func @transform_14(%arg0: i32, %arg1: i32) -> (i32, i32) {
    %c0_i32 = arith.constant 0 : i32
    %c0_i32_0 = arith.constant 0 : i32
    %c0_i32_1 = arith.constant 0 : i32
    return %c0_i32, %c0_i32_0 : i32, i32
  }
  func.func @transform_15(%arg0: i32, %arg1: i32) -> (i32, i32) {
    %c0_i32 = arith.constant 0 : i32
    %c0_i32_0 = arith.constant 0 : i32
    %c0_i32_1 = arith.constant 0 : i32
    return %c0_i32, %c0_i32_0 : i32, i32
  }
  func.func @transform_16(%arg0: i32, %arg1: i32) -> (i32, i32) {
    %c0_i32 = arith.constant 0 : i32
    %c0_i32_0 = arith.constant 0 : i32
    %c0_i32_1 = arith.constant 0 : i32
    return %c0_i32, %c0_i32_0 : i32, i32
  }
  func.func @transform_17(%arg0: i32, %arg1: i32) -> (i32, i32) {
    %c0_i32 = arith.constant 0 : i32
    %c0_i32_0 = arith.constant 0 : i32
    %c0_i32_1 = arith.constant 0 : i32
    return %c0_i32, %c0_i32_0 : i32, i32
  }
  func.func @transform_18(%arg0: i32, %arg1: i32) -> (i32, i32, i32) {
    %c0_i32 = arith.constant 0 : i32
    %c0_i32_0 = arith.constant 0 : i32
    return %arg0, %arg1, %c0_i32 : i32, i32, i32
  }
}

</mosaic_0001>

<llo_original>
// kernel: tpu_custom_call.1
$region0: #{tpu_custom_call.1}
  #allocation0 [shape = 'u32[]', space=smem, size = 0x4, offset = 0x4, fixed_abs, tag = 'smem constant byte address 0x4 - core index']
  #allocation1 [shape = 'u32[144,128]{1,0:T(1,128)}', space=vmem, size = 0x12000, scoped, tag = 'internal scratch']
  %s0 = inlined_call_operand.hbm [shape: f32[2,8,32], index: 0, kind: input, shape index: {}]
  %s1 = inlined_call_operand.hbm [shape: f32[2,8,32], index: 1, kind: input, shape index: {}]
  %s2 = inlined_call_operand.vmem [shape: f32[1,32], index: 2, kind: input, shape index: {}]
  %s3 = inlined_call_operand.vmem [shape: f32[1,32], index: 3, kind: input, shape index: {}]
  %s4 = inlined_call_operand.vmem [shape: f32[32,32], index: 4, kind: input, shape index: {}]
  %s5 = inlined_call_operand.vmem [shape: f32[1,32], index: 5, kind: input, shape index: {}]
  %s6 = inlined_call_operand.vmem [shape: f32[32,32], index: 6, kind: input, shape index: {}]
  %s7 = inlined_call_operand.vmem [shape: f32[1,32], index: 7, kind: input, shape index: {}]
  %s8 = inlined_call_operand.vmem [shape: f32[32,32], index: 8, kind: input, shape index: {}]
  %s9 = inlined_call_operand.vmem [shape: f32[1,32], index: 9, kind: input, shape index: {}]
  %s10 = inlined_call_operand.vmem [shape: f32[32,32], index: 10, kind: input, shape index: {}]
  %s11 = inlined_call_operand.vmem [shape: f32[1,32], index: 11, kind: input, shape index: {}]
  %s12 = inlined_call_operand.vmem [shape: f32[1,32], index: 12, kind: input, shape index: {}]
  %s13 = inlined_call_operand.vmem [shape: f32[1,32], index: 13, kind: input, shape index: {}]
  %s14 = inlined_call_operand.vmem [shape: f32[32,128], index: 14, kind: input, shape index: {}]
  %s15 = inlined_call_operand.vmem [shape: f32[1,128], index: 15, kind: input, shape index: {}]
  %s16 = inlined_call_operand.vmem [shape: f32[128,32], index: 16, kind: input, shape index: {}]
  %s17 = inlined_call_operand.vmem [shape: f32[1,32], index: 17, kind: input, shape index: {}]
  %s18 = inlined_call_operand.hbm [shape: f32[2,8,32], index: 18, kind: output, shape index: {}]
  %s19 = sld [smem:[#allocation0]]
  $region113: #{tpu_custom_call.1} parent=0
    _
  %s21 = ssub.s32 1, %s19
  %s22 = scalar_select 0, %s21, %s19
  $region1: #{tpu_custom_call.1} parent=0
    #allocation2 [shape = 'u8[8192]{0}', space=vmem, size = 0x2000, scoped, tag = 'input window, operand 0']
    #allocation3 [shape = 's32[2]{0}', space=sflag, size = 0x8, scoped, tag = 'scoped memory for tpu_custom_call.1']
    #allocation4 [shape = 's32[2]{0}', space=sflag, size = 0x8, scoped, tag = 'scoped memory for tpu_custom_call.1']
    #allocation5 [shape = 'u8[8192]{0}', space=vmem, size = 0x2000, scoped, tag = 'input window, operand 1']
    #allocation6 [shape = 's32[2]{0}', space=sflag, size = 0x8, scoped, tag = 'scoped memory for tpu_custom_call.1']
    #allocation7 [shape = 'u8[8192]{0}', space=vmem, size = 0x2000, scoped, tag = 'output window, operand 0']
    %23 = vsyncpa [#allocation3], 0
    %s24 = scalar_lea.sflag [#allocation3], 1
    %25 = vsyncpa %s24, 0
    %26 = vsyncpa [#allocation6], 0
    %s27 = scalar_lea.sflag [#allocation6], 1
    %28 = vsyncpa %s27, 0
    %29 = vsyncpa [#allocation4], 0
    %s30 = scalar_lea.sflag [#allocation4], 1
    %31 = vsyncpa %s30, 0
    loop: start=0, step=1, limit=4
    $region2: #{tpu_custom_call.1} parent=1 // loop_pre_header
      _
    $region3: #{tpu_custom_call.1} parent=1 // loop_header
      %s33 = sphi 0, %s37
      %p34 = scmp.ge.s32.totalorder %s33, 4
      %s40 = sphi 0, %s52
      %s41 = sphi 0, %s48
      %s42 = sphi 0, %s40
      %s43 = sphi 0, %s41
      %s44 = sphi 0, %s42
      %s45 = sphi 0, %s43
      %s57 = sphi 0, %s59
      %s60 = sphi 0, %s57
      %s61 = sphi 0, %s60
      %s77 = sphi 0, %s61
      %s83 = sphi 0, %s85
      %s86 = sphi 0, %s83
      %s87 = sphi 0, %s86
      %s103 = sphi 0, %s87
      %s107 = sphi 0, %s107
      %s109 = sphi 0, %s107
      %s110 = sphi 0, %s109
      %s124 = sphi 0, %s110
      %s128 = sphi 0, %s128
      %s130 = sphi 0, %s128
      %s131 = sphi 0, %s130
      %s145 = sphi 0, %s131
      %s149 = sphi 0, %s149
      %s151 = sphi 0, %s149
      %s152 = sphi 0, %s151
      %s166 = sphi 0, %s152
      %s170 = sphi 0, %s170
      %s172 = sphi 0, %s170
      %s173 = sphi 0, %s172
      %s187 = sphi 0, %s173
      %s191 = sphi 0, %s191
      %s193 = sphi 0, %s191
      %s194 = sphi 0, %s193
      %s208 = sphi 0, %s194
      %s212 = sphi 0, %s212
      %s214 = sphi 0, %s212
      %s215 = sphi 0, %s214
      %s229 = sphi 0, %s215
      %s233 = sphi 0, %s233
      %s235 = sphi 0, %s233
      %s236 = sphi 0, %s235
      %s250 = sphi 0, %s236
      %s254 = sphi 0, %s254
      %s256 = sphi 0, %s254
      %s257 = sphi 0, %s256
      %s271 = sphi 0, %s257
      %s275 = sphi 0, %s275
      %s277 = sphi 0, %s275
      %s278 = sphi 0, %s277
      %s292 = sphi 0, %s278
      %s296 = sphi 0, %s296
      %s298 = sphi 0, %s296
      %s299 = sphi 0, %s298
      %s313 = sphi 0, %s299
      %s317 = sphi 0, %s317
      %s319 = sphi 0, %s317
      %s320 = sphi 0, %s319
      %s334 = sphi 0, %s320
      %s338 = sphi 0, %s338
      %s340 = sphi 0, %s338
      %s341 = sphi 0, %s340
      %s355 = sphi 0, %s341
      %s359 = sphi 0, %s359
      %s361 = sphi 0, %s359
      %s362 = sphi 0, %s361
      %s376 = sphi 0, %s362
      %s380 = sphi 0, %s380
      %s382 = sphi 0, %s380
      %s383 = sphi 0, %s382
      %s397 = sphi 0, %s383
      %s401 = sphi 0, %s401
      %s403 = sphi 0, %s401
      %s404 = sphi 0, %s403
      %s418 = sphi 0, %s404
      %s422 = sphi 0, %s422
      %s424 = sphi 0, %s422
      %s425 = sphi 0, %s424
      %s439 = sphi 0, %s425
      %s447 = sphi 0, %s449
      %s450 = sphi 0, %s447
      %s451 = sphi 0, %s450
      %s467 = sphi 0, %s451
    $region4: #{tpu_custom_call.1} parent=1 // loop_header_branch
      %36 = sbr.rel (%p34) target = $region8
    $region5: #{tpu_custom_call.1} parent=1 // loop_body
      %s38 = ssub.s32 %s33, 1
      %s39 = ssub.s32 %s33, 2
      %s46 = sadd.s32 1, %s41
      %p47 = scmp.ge.s32.totalorder %s46, 1
      %s48 = scalar_select %p47, 0, %s46
      %s49 = sadd.s32 1, %s40
      %s50 = scalar_select %p47, %s49, %s40
      %p51 = scmp.ge.s32.totalorder %s50, 2
      %s52 = scalar_select %p51, 0, %s50
      %s53 = ssub.s32 %s40, %s52
      %s54 = ssub.s32 %s41, %s48
      %s55 = sor.u32 %s53, %s54
      %p56 = scmp.eq.s32.totalorder %s55, 0
      %s58 = sadd.s32 %s57, 1
      %s59 = scalar_select %p56, %s57, %s58
      %p62 = pneg %p56
      %p63 = scmp.eq.s32.totalorder %s33, 1
      %p64 = por %p62, %p63
      %p65 = scmp.ne.s32.totalorder %s57, %s60
      %p66 = scmp.eq.s32.totalorder %s33, 0
      %p67 = por %p65, %p66
      %p68 = scmp.ne.s32.totalorder %s57, %s60
      %p69 = scmp.eq.s32.totalorder %s38, 1
      %p70 = por %p68, %p69
      %p71 = scmp.ne.s32.totalorder %s60, %s61
      %p72 = scmp.eq.s32.totalorder %s38, 0
      %p73 = por %p71, %p72
      %p74 = scmp.ne.s32.totalorder %s60, %s61
      %p75 = scmp.eq.s32.totalorder %s39, 1
      %p76 = por %p74, %p75
      %p78 = scmp.ne.s32.totalorder %s61, %s77
      %p79 = scmp.eq.s32.totalorder %s39, 0
      %p80 = por %p78, %p79
      %s81 = ssub.s32 %s40, %s52
      %p82 = scmp.eq.s32.totalorder %s81, 0
      %s84 = sadd.s32 %s83, 1
      %s85 = scalar_select %p82, %s83, %s84
      %p88 = pneg %p82
      %p89 = scmp.eq.s32.totalorder %s33, 1
      %p90 = por %p88, %p89
      %p91 = scmp.ne.s32.totalorder %s83, %s86
      %p92 = scmp.eq.s32.totalorder %s33, 0
      %p93 = por %p91, %p92
      %p94 = scmp.ne.s32.totalorder %s83, %s86
      %p95 = scmp.eq.s32.totalorder %s38, 1
      %p96 = por %p94, %p95
      %p97 = scmp.ne.s32.totalorder %s86, %s87
      %p98 = scmp.eq.s32.totalorder %s38, 0
      %p99 = por %p97, %p98
      %p100 = scmp.ne.s32.totalorder %s86, %s87
      %p101 = scmp.eq.s32.totalorder %s39, 1
      %p102 = por %p100, %p101
      %p104 = scmp.ne.s32.totalorder %s87, %s103
      %p105 = scmp.eq.s32.totalorder %s39, 0
      %p106 = por %p104, %p105
      %s108 = sadd.s32 %s107, 1
      %p111 = scmp.eq.s32.totalorder %s33, 1
      %p112 = scmp.ne.s32.totalorder %s107, %s109
      %p113 = scmp.eq.s32.totalorder %s33, 0
      %p114 = por %p112, %p113
      %p115 = scmp.ne.s32.totalorder %s107, %s109
      %p116 = scmp.eq.s32.totalorder %s38, 1
      %p117 = por %p115, %p116
      %p118 = scmp.ne.s32.totalorder %s109, %s110
      %p119 = scmp.eq.s32.totalorder %s38, 0
      %p120 = por %p118, %p119
      %p121 = scmp.ne.s32.totalorder %s109, %s110
      %p122 = scmp.eq.s32.totalorder %s39, 1
      %p123 = por %p121, %p122
      %p125 = scmp.ne.s32.totalorder %s110, %s124
      %p126 = scmp.eq.s32.totalorder %s39, 0
      %p127 = por %p125, %p126
      %s129 = sadd.s32 %s128, 1
      %p132 = scmp.eq.s32.totalorder %s33, 1
      %p133 = scmp.ne.s32.totalorder %s128, %s130
      %p134 = scmp.eq.s32.totalorder %s33, 0
      %p135 = por %p133, %p134
      %p136 = scmp.ne.s32.totalorder %s128, %s130
      %p137 = scmp.eq.s32.totalorder %s38, 1
      %p138 = por %p136, %p137
      %p139 = scmp.ne.s32.totalorder %s130, %s131
      %p140 = scmp.eq.s32.totalorder %s38, 0
      %p141 = por %p139, %p140
      %p142 = scmp.ne.s32.totalorder %s130, %s131
      %p143 = scmp.eq.s32.totalorder %s39, 1
      %p144 = por %p142, %p143
      %p146 = scmp.ne.s32.totalorder %s131, %s145
      %p147 = scmp.eq.s32.totalorder %s39, 0
      %p148 = por %p146, %p147
      %s150 = sadd.s32 %s149, 1
      %p153 = scmp.eq.s32.totalorder %s33, 1
      %p154 = scmp.ne.s32.totalorder %s149, %s151
      %p155 = scmp.eq.s32.totalorder %s33, 0
      %p156 = por %p154, %p155
      %p157 = scmp.ne.s32.totalorder %s149, %s151
      %p158 = scmp.eq.s32.totalorder %s38, 1
      %p159 = por %p157, %p158
      %p160 = scmp.ne.s32.totalorder %s151, %s152
      %p161 = scmp.eq.s32.totalorder %s38, 0
      %p162 = por %p160, %p161
      %p163 = scmp.ne.s32.totalorder %s151, %s152
      %p164 = scmp.eq.s32.totalorder %s39, 1
      %p165 = por %p163, %p164
      %p167 = scmp.ne.s32.totalorder %s152, %s166
      %p168 = scmp.eq.s32.totalorder %s39, 0
      %p169 = por %p167, %p168
      %s171 = sadd.s32 %s170, 1
      %p174 = scmp.eq.s32.totalorder %s33, 1
      %p175 = scmp.ne.s32.totalorder %s170, %s172
      %p176 = scmp.eq.s32.totalorder %s33, 0
      %p177 = por %p175, %p176
      %p178 = scmp.ne.s32.totalorder %s170, %s172
      %p179 = scmp.eq.s32.totalorder %s38, 1
      %p180 = por %p178, %p179
      %p181 = scmp.ne.s32.totalorder %s172, %s173
      %p182 = scmp.eq.s32.totalorder %s38, 0
      %p183 = por %p181, %p182
      %p184 = scmp.ne.s32.totalorder %s172, %s173
      %p185 = scmp.eq.s32.totalorder %s39, 1
      %p186 = por %p184, %p185
      %p188 = scmp.ne.s32.totalorder %s173, %s187
      %p189 = scmp.eq.s32.totalorder %s39, 0
      %p190 = por %p188, %p189
      %s192 = sadd.s32 %s191, 1
      %p195 = scmp.eq.s32.totalorder %s33, 1
      %p196 = scmp.ne.s32.totalorder %s191, %s193
      %p197 = scmp.eq.s32.totalorder %s33, 0
      %p198 = por %p196, %p197
      %p199 = scmp.ne.s32.totalorder %s191, %s193
      %p200 = scmp.eq.s32.totalorder %s38, 1
      %p201 = por %p199, %p200
      %p202 = scmp.ne.s32.totalorder %s193, %s194
      %p203 = scmp.eq.s32.totalorder %s38, 0
      %p204 = por %p202, %p203
      %p205 = scmp.ne.s32.totalorder %s193, %s194
      %p206 = scmp.eq.s32.totalorder %s39, 1
      %p207 = por %p205, %p206
      %p209 = scmp.ne.s32.totalorder %s194, %s208
      %p210 = scmp.eq.s32.totalorder %s39, 0
      %p211 = por %p209, %p210
      %s213 = sadd.s32 %s212, 1
      %p216 = scmp.eq.s32.totalorder %s33, 1
      %p217 = scmp.ne.s32.totalorder %s212, %s214
      %p218 = scmp.eq.s32.totalorder %s33, 0
      %p219 = por %p217, %p218
      %p220 = scmp.ne.s32.totalorder %s212, %s214
      %p221 = scmp.eq.s32.totalorder %s38, 1
      %p222 = por %p220, %p221
      %p223 = scmp.ne.s32.totalorder %s214, %s215
      %p224 = scmp.eq.s32.totalorder %s38, 0
      %p225 = por %p223, %p224
      %p226 = scmp.ne.s32.totalorder %s214, %s215
      %p227 = scmp.eq.s32.totalorder %s39, 1
      %p228 = por %p226, %p227
      %p230 = scmp.ne.s32.totalorder %s215, %s229
      %p231 = scmp.eq.s32.totalorder %s39, 0
      %p232 = por %p230, %p231
      %s234 = sadd.s32 %s233, 1
      %p237 = scmp.eq.s32.totalorder %s33, 1
      %p238 = scmp.ne.s32.totalorder %s233, %s235
      %p239 = scmp.eq.s32.totalorder %s33, 0
      %p240 = por %p238, %p239
      %p241 = scmp.ne.s32.totalorder %s233, %s235
      %p242 = scmp.eq.s32.totalorder %s38, 1
      %p243 = por %p241, %p242
      %p244 = scmp.ne.s32.totalorder %s235, %s236
      %p245 = scmp.eq.s32.totalorder %s38, 0
      %p246 = por %p244, %p245
      %p247 = scmp.ne.s32.totalorder %s235, %s236
      %p248 = scmp.eq.s32.totalorder %s39, 1
      %p249 = por %p247, %p248
      %p251 = scmp.ne.s32.totalorder %s236, %s250
      %p252 = scmp.eq.s32.totalorder %s39, 0
      %p253 = por %p251, %p252
      %s255 = sadd.s32 %s254, 1
      %p258 = scmp.eq.s32.totalorder %s33, 1
      %p259 = scmp.ne.s32.totalorder %s254, %s256
      %p260 = scmp.eq.s32.totalorder %s33, 0
      %p261 = por %p259, %p260
      %p262 = scmp.ne.s32.totalorder %s254, %s256
      %p263 = scmp.eq.s32.totalorder %s38, 1
      %p264 = por %p262, %p263
      %p265 = scmp.ne.s32.totalorder %s256, %s257
      %p266 = scmp.eq.s32.totalorder %s38, 0
      %p267 = por %p265, %p266
      %p268 = scmp.ne.s32.totalorder %s256, %s257
      %p269 = scmp.eq.s32.totalorder %s39, 1
      %p270 = por %p268, %p269
      %p272 = scmp.ne.s32.totalorder %s257, %s271
      %p273 = scmp.eq.s32.totalorder %s39, 0
      %p274 = por %p272, %p273
      %s276 = sadd.s32 %s275, 1
      %p279 = scmp.eq.s32.totalorder %s33, 1
      %p280 = scmp.ne.s32.totalorder %s275, %s277
      %p281 = scmp.eq.s32.totalorder %s33, 0
      %p282 = por %p280, %p281
      %p283 = scmp.ne.s32.totalorder %s275, %s277
      %p284 = scmp.eq.s32.totalorder %s38, 1
      %p285 = por %p283, %p284
      %p286 = scmp.ne.s32.totalorder %s277, %s278
      %p287 = scmp.eq.s32.totalorder %s38, 0
      %p288 = por %p286, %p287
      %p289 = scmp.ne.s32.totalorder %s277, %s278
      %p290 = scmp.eq.s32.totalorder %s39, 1
      %p291 = por %p289, %p290
      %p293 = scmp.ne.s32.totalorder %s278, %s292
      %p294 = scmp.eq.s32.totalorder %s39, 0
      %p295 = por %p293, %p294
      %s297 = sadd.s32 %s296, 1
      %p300 = scmp.eq.s32.totalorder %s33, 1
      %p301 = scmp.ne.s32.totalorder %s296, %s298
      %p302 = scmp.eq.s32.totalorder %s33, 0
      %p303 = por %p301, %p302
      %p304 = scmp.ne.s32.totalorder %s296, %s298
      %p305 = scmp.eq.s32.totalorder %s38, 1
      %p306 = por %p304, %p305
      %p307 = scmp.ne.s32.totalorder %s298, %s299
      %p308 = scmp.eq.s32.totalorder %s38, 0
      %p309 = por %p307, %p308
      %p310 = scmp.ne.s32.totalorder %s298, %s299
      %p311 = scmp.eq.s32.totalorder %s39, 1
      %p312 = por %p310, %p311
      %p314 = scmp.ne.s32.totalorder %s299, %s313
      %p315 = scmp.eq.s32.totalorder %s39, 0
      %p316 = por %p314, %p315
      %s318 = sadd.s32 %s317, 1
      %p321 = scmp.eq.s32.totalorder %s33, 1
      %p322 = scmp.ne.s32.totalorder %s317, %s319
      %p323 = scmp.eq.s32.totalorder %s33, 0
      %p324 = por %p322, %p323
      %p325 = scmp.ne.s32.totalorder %s317, %s319
      %p326 = scmp.eq.s32.totalorder %s38, 1
      %p327 = por %p325, %p326
      %p328 = scmp.ne.s32.totalorder %s319, %s320
      %p329 = scmp.eq.s32.totalorder %s38, 0
      %p330 = por %p328, %p329
      %p331 = scmp.ne.s32.totalorder %s319, %s320
      %p332 = scmp.eq.s32.totalorder %s39, 1
      %p333 = por %p331, %p332
      %p335 = scmp.ne.s32.totalorder %s320, %s334
      %p336 = scmp.eq.s32.totalorder %s39, 0
      %p337 = por %p335, %p336
      %s339 = sadd.s32 %s338, 1
      %p342 = scmp.eq.s32.totalorder %s33, 1
      %p343 = scmp.ne.s32.totalorder %s338, %s340
      %p344 = scmp.eq.s32.totalorder %s33, 0
      %p345 = por %p343, %p344
      %p346 = scmp.ne.s32.totalorder %s338, %s340
      %p347 = scmp.eq.s32.totalorder %s38, 1
      %p348 = por %p346, %p347
      %p349 = scmp.ne.s32.totalorder %s340, %s341
      %p350 = scmp.eq.s32.totalorder %s38, 0
      %p351 = por %p349, %p350
      %p352 = scmp.ne.s32.totalorder %s340, %s341
      %p353 = scmp.eq.s32.totalorder %s39, 1
      %p354 = por %p352, %p353
      %p356 = scmp.ne.s32.totalorder %s341, %s355
      %p357 = scmp.eq.s32.totalorder %s39, 0
      %p358 = por %p356, %p357
      %s360 = sadd.s32 %s359, 1
      %p363 = scmp.eq.s32.totalorder %s33, 1
      %p364 = scmp.ne.s32.totalorder %s359, %s361
      %p365 = scmp.eq.s32.totalorder %s33, 0
      %p366 = por %p364, %p365
      %p367 = scmp.ne.s32.totalorder %s359, %s361
      %p368 = scmp.eq.s32.totalorder %s38, 1
      %p369 = por %p367, %p368
      %p370 = scmp.ne.s32.totalorder %s361, %s362
      %p371 = scmp.eq.s32.totalorder %s38, 0
      %p372 = por %p370, %p371
      %p373 = scmp.ne.s32.totalorder %s361, %s362
      %p374 = scmp.eq.s32.totalorder %s39, 1
      %p375 = por %p373, %p374
      %p377 = scmp.ne.s32.totalorder %s362, %s376
      %p378 = scmp.eq.s32.totalorder %s39, 0
      %p379 = por %p377, %p378
      %s381 = sadd.s32 %s380, 1
      %p384 = scmp.eq.s32.totalorder %s33, 1
      %p385 = scmp.ne.s32.totalorder %s380, %s382
      %p386 = scmp.eq.s32.totalorder %s33, 0
      %p387 = por %p385, %p386
      %p388 = scmp.ne.s32.totalorder %s380, %s382
      %p389 = scmp.eq.s32.totalorder %s38, 1
      %p390 = por %p388, %p389
      %p391 = scmp.ne.s32.totalorder %s382, %s383
      %p392 = scmp.eq.s32.totalorder %s38, 0
      %p393 = por %p391, %p392
      %p394 = scmp.ne.s32.totalorder %s382, %s383
      %p395 = scmp.eq.s32.totalorder %s39, 1
      %p396 = por %p394, %p395
      %p398 = scmp.ne.s32.totalorder %s383, %s397
      %p399 = scmp.eq.s32.totalorder %s39, 0
      %p400 = por %p398, %p399
      %s402 = sadd.s32 %s401, 1
      %p405 = scmp.eq.s32.totalorder %s33, 1
      %p406 = scmp.ne.s32.totalorder %s401, %s403
      %p407 = scmp.eq.s32.totalorder %s33, 0
      %p408 = por %p406, %p407
      %p409 = scmp.ne.s32.totalorder %s401, %s403
      %p410 = scmp.eq.s32.totalorder %s38, 1
      %p411 = por %p409, %p410
      %p412 = scmp.ne.s32.totalorder %s403, %s404
      %p413 = scmp.eq.s32.totalorder %s38, 0
      %p414 = por %p412, %p413
      %p415 = scmp.ne.s32.totalorder %s403, %s404
      %p416 = scmp.eq.s32.totalorder %s39, 1
      %p417 = por %p415, %p416
      %p419 = scmp.ne.s32.totalorder %s404, %s418
      %p420 = scmp.eq.s32.totalorder %s39, 0
      %p421 = por %p419, %p420
      %s423 = sadd.s32 %s422, 1
      %p426 = scmp.eq.s32.totalorder %s33, 1
      %p427 = scmp.ne.s32.totalorder %s422, %s424
      %p428 = scmp.eq.s32.totalorder %s33, 0
      %p429 = por %p427, %p428
      %p430 = scmp.ne.s32.totalorder %s422, %s424
      %p431 = scmp.eq.s32.totalorder %s38, 1
      %p432 = por %p430, %p431
      %p433 = scmp.ne.s32.totalorder %s424, %s425
      %p434 = scmp.eq.s32.totalorder %s38, 0
      %p435 = por %p433, %p434
      %p436 = scmp.ne.s32.totalorder %s424, %s425
      %p437 = scmp.eq.s32.totalorder %s39, 1
      %p438 = por %p436, %p437
      %p440 = scmp.ne.s32.totalorder %s425, %s439
      %p441 = scmp.eq.s32.totalorder %s39, 0
      %p442 = por %p440, %p441
      %s443 = ssub.s32 %s40, %s52
      %s444 = ssub.s32 %s41, %s48
      %s445 = sor.u32 %s443, %s444
      %p446 = scmp.eq.s32.totalorder %s445, 0
      %s448 = sadd.s32 %s447, 1
      %s449 = scalar_select %p446, %s447, %s448
      %p452 = pneg %p446
      %p453 = scmp.eq.s32.totalorder %s33, 1
      %p454 = por %p452, %p453
      %p455 = scmp.ne.s32.totalorder %s447, %s450
      %p456 = scmp.eq.s32.totalorder %s33, 0
      %p457 = por %p455, %p456
      %p458 = scmp.ne.s32.totalorder %s447, %s450
      %p459 = scmp.eq.s32.totalorder %s38, 1
      %p460 = por %p458, %p459
      %p461 = scmp.ne.s32.totalorder %s450, %s451
      %p462 = scmp.eq.s32.totalorder %s38, 0
      %p463 = por %p461, %p462
      %p464 = scmp.ne.s32.totalorder %s450, %s451
      %p465 = scmp.eq.s32.totalorder %s39, 1
      %p466 = por %p464, %p465
      %p468 = scmp.ne.s32.totalorder %s451, %s467
      %p469 = scmp.eq.s32.totalorder %s39, 0
      %p470 = por %p468, %p469
      %p471 = scmp.le.s32.totalorder 1, %s33
      %p472 = scmp.lt.s32.totalorder %s33, 3
      %p473 = pnand %p471, %p472
      %p474 = pneg %p473
      // Predicated region
      $region9: #{tpu_custom_call.1} parent=5 // pred_check
        _
      $region10: #{tpu_custom_call.1} parent=5 // pred_check_branch
        %476 = sbr.rel (%p473) target = $region12
      $region11: #{tpu_custom_call.1} parent=5 // pred_region
        %s477 = ssub.s32 %s33, 1
        // Predicated region
        $region13: #{tpu_custom_call.1} parent=11 // pred_check
          %p478 = pneg %p120
        $region14: #{tpu_custom_call.1} parent=11 // pred_check_branch
          %480 = sbr.rel (%p478) target = $region16
        $region15: #{tpu_custom_call.1} parent=11 // pred_region
          _
        $region16: #{tpu_custom_call.1} parent=11 // pred_fallthru
          _
        // Predicated region
        $region17: #{tpu_custom_call.1} parent=11 // pred_check
          %p481 = pneg %p141
        $region18: #{tpu_custom_call.1} parent=11 // pred_check_branch
          %483 = sbr.rel (%p481) target = $region20
        $region19: #{tpu_custom_call.1} parent=11 // pred_region
          _
        $region20: #{tpu_custom_call.1} parent=11 // pred_fallthru
          _
        // Predicated region
        $region21: #{tpu_custom_call.1} parent=11 // pred_check
          %p484 = pneg %p162
        $region22: #{tpu_custom_call.1} parent=11 // pred_check_branch
          %486 = sbr.rel (%p484) target = $region24
        $region23: #{tpu_custom_call.1} parent=11 // pred_region
          _
        $region24: #{tpu_custom_call.1} parent=11 // pred_fallthru
          _
        // Predicated region
        $region25: #{tpu_custom_call.1} parent=11 // pred_check
          %p487 = pneg %p183
        $region26: #{tpu_custom_call.1} parent=11 // pred_check_branch
          %489 = sbr.rel (%p487) target = $region28
        $region27: #{tpu_custom_call.1} parent=11 // pred_region
          _
        $region28: #{tpu_custom_call.1} parent=11 // pred_fallthru
          _
        // Predicated region
        $region29: #{tpu_custom_call.1} parent=11 // pred_check
          %p490 = pneg %p204
        $region30: #{tpu_custom_call.1} parent=11 // pred_check_branch
          %492 = sbr.rel (%p490) target = $region32
        $region31: #{tpu_custom_call.1} parent=11 // pred_region
          _
        $region32: #{tpu_custom_call.1} parent=11 // pred_fallthru
          _
        // Predicated region
        $region33: #{tpu_custom_call.1} parent=11 // pred_check
          %p493 = pneg %p225
        $region34: #{tpu_custom_call.1} parent=11 // pred_check_branch
          %495 = sbr.rel (%p493) target = $region36
        $region35: #{tpu_custom_call.1} parent=11 // pred_region
          _
        $region36: #{tpu_custom_call.1} parent=11 // pred_fallthru
          _
        // Predicated region
        $region37: #{tpu_custom_call.1} parent=11 // pred_check
          %p496 = pneg %p246
        $region38: #{tpu_custom_call.1} parent=11 // pred_check_branch
          %498 = sbr.rel (%p496) target = $region40
        $region39: #{tpu_custom_call.1} parent=11 // pred_region
          _
        $region40: #{tpu_custom_call.1} parent=11 // pred_fallthru
          _
        // Predicated region
        $region41: #{tpu_custom_call.1} parent=11 // pred_check
          %p499 = pneg %p267
        $region42: #{tpu_custom_call.1} parent=11 // pred_check_branch
          %501 = sbr.rel (%p499) target = $region44
        $region43: #{tpu_custom_call.1} parent=11 // pred_region
          _
        $region44: #{tpu_custom_call.1} parent=11 // pred_fallthru
          _
        // Predicated region
        $region45: #{tpu_custom_call.1} parent=11 // pred_check
          %p502 = pneg %p288
        $region46: #{tpu_custom_call.1} parent=11 // pred_check_branch
          %504 = sbr.rel (%p502) target = $region48
        $region47: #{tpu_custom_call.1} parent=11 // pred_region
          _
        $region48: #{tpu_custom_call.1} parent=11 // pred_fallthru
          _
        // Predicated region
        $region49: #{tpu_custom_call.1} parent=11 // pred_check
          %p505 = pneg %p309
        $region50: #{tpu_custom_call.1} parent=11 // pred_check_branch
          %507 = sbr.rel (%p505) target = $region52
        $region51: #{tpu_custom_call.1} parent=11 // pred_region
          _
        $region52: #{tpu_custom_call.1} parent=11 // pred_fallthru
          _
        // Predicated region
        $region53: #{tpu_custom_call.1} parent=11 // pred_check
          %p508 = pneg %p330
        $region54: #{tpu_custom_call.1} parent=11 // pred_check_branch
          %510 = sbr.rel (%p508) target = $region56
        $region55: #{tpu_custom_call.1} parent=11 // pred_region
          _
        $region56: #{tpu_custom_call.1} parent=11 // pred_fallthru
          _
        // Predicated region
        $region57: #{tpu_custom_call.1} parent=11 // pred_check
          %p511 = pneg %p351
        $region58: #{tpu_custom_call.1} parent=11 // pred_check_branch
          %513 = sbr.rel (%p511) target = $region60
        $region59: #{tpu_custom_call.1} parent=11 // pred_region
          _
        $region60: #{tpu_custom_call.1} parent=11 // pred_fallthru
          _
        // Predicated region
        $region61: #{tpu_custom_call.1} parent=11 // pred_check
          %p514 = pneg %p372
        $region62: #{tpu_custom_call.1} parent=11 // pred_check_branch
          %516 = sbr.rel (%p514) target = $region64
        $region63: #{tpu_custom_call.1} parent=11 // pred_region
          _
        $region64: #{tpu_custom_call.1} parent=11 // pred_fallthru
          _
        // Predicated region
        $region65: #{tpu_custom_call.1} parent=11 // pred_check
          %p517 = pneg %p393
        $region66: #{tpu_custom_call.1} parent=11 // pred_check_branch
          %519 = sbr.rel (%p517) target = $region68
        $region67: #{tpu_custom_call.1} parent=11 // pred_region
          _
        $region68: #{tpu_custom_call.1} parent=11 // pred_fallthru
          _
        // Predicated region
        $region69: #{tpu_custom_call.1} parent=11 // pred_check
          %p520 = pneg %p414
        $region70: #{tpu_custom_call.1} parent=11 // pred_check_branch
          %522 = sbr.rel (%p520) target = $region72
        $region71: #{tpu_custom_call.1} parent=11 // pred_region
          _
        $region72: #{tpu_custom_call.1} parent=11 // pred_fallthru
          _
        // Predicated region
        $region73: #{tpu_custom_call.1} parent=11 // pred_check
          %p523 = pneg %p435
        $region74: #{tpu_custom_call.1} parent=11 // pred_check_branch
          %525 = sbr.rel (%p523) target = $region76
        $region75: #{tpu_custom_call.1} parent=11 // pred_region
          _
        $region76: #{tpu_custom_call.1} parent=11 // pred_fallthru
          _
      $region12: #{tpu_custom_call.1} parent=5 // pred_fallthru
        _
      %p526 = scmp.lt.s32.totalorder %s33, 2
      // Predicated region
      $region77: #{tpu_custom_call.1} parent=5 // pred_check
        %p527 = pneg %p526
      $region78: #{tpu_custom_call.1} parent=5 // pred_check_branch
        %529 = sbr.rel (%p527) target = $region80
      $region79: #{tpu_custom_call.1} parent=5 // pred_region
        // Predicated region
        $region81: #{tpu_custom_call.1} parent=79 // pred_check
          %p530 = pneg %p67
        $region82: #{tpu_custom_call.1} parent=79 // pred_check_branch
          %532 = sbr.rel (%p530) target = $region84
        $region83: #{tpu_custom_call.1} parent=79 // pred_region
          %s533 = sand.u32 %s57, 1
          %s534 = scalar_lea.sflag [#allocation3], %s533
          %s535 = sand.u32 %s57, 1
          %s536 = smul.addr %s535, 8
          %s537 = scalar_lea.vmem [#allocation2], %s536
          %s539 = ssub.s32 128, 128
          %540 = vsyncadd %s534, %s539
          %s541 = sadd.s32 %s41, %s40
          %s542 = smul.addr %s541, 128
          %s543 = scalar_lea.hbm %s0, %s542
          %s545 = sshll.u32 %s537, 4
          %s546 = int_to_ptr.vmem [resolvable:$true] %s545
          %548 = dma.hbm_to_vmem [thread:$0]  %s543, 128, %s546, %s534
        $region84: #{tpu_custom_call.1} parent=79 // pred_fallthru
          _
        // Predicated region
        $region85: #{tpu_custom_call.1} parent=79 // pred_check
          %p549 = pneg %p93
        $region86: #{tpu_custom_call.1} parent=79 // pred_check_branch
          %551 = sbr.rel (%p549) target = $region88
        $region87: #{tpu_custom_call.1} parent=79 // pred_region
          %s552 = sand.u32 %s83, 1
          %s553 = scalar_lea.sflag [#allocation6], %s552
          %s554 = sand.u32 %s83, 1
          %s555 = smul.addr %s554, 8
          %s556 = scalar_lea.vmem [#allocation5], %s555
          %s558 = ssub.s32 128, 128
          %559 = vsyncadd %s553, %s558
          %s560 = smul.addr %s40, 128
          %s561 = scalar_lea.hbm %s1, %s560
          %s563 = sshll.u32 %s556, 4
          %s564 = int_to_ptr.vmem [resolvable:$true] %s563
          %566 = dma.hbm_to_vmem [thread:$0]  %s561, 128, %s564, %s553
        $region88: #{tpu_custom_call.1} parent=79 // pred_fallthru
          _
      $region80: #{tpu_custom_call.1} parent=5 // pred_fallthru
        _
      %p567 = scmp.le.s32.totalorder 1, %s33
      %p568 = scmp.lt.s32.totalorder %s33, 3
      %p569 = pnand %p567, %p568
      %p570 = pneg %p569
      // Predicated region
      $region89: #{tpu_custom_call.1} parent=5 // pred_check
        _
      $region90: #{tpu_custom_call.1} parent=5 // pred_check_branch
        %572 = sbr.rel (%p569) target = $region92
      $region91: #{tpu_custom_call.1} parent=5 // pred_region
        %s573 = ssub.s32 %s33, 1
        %s574 = sand.u32 %s60, 1
        %s575 = scalar_lea.sflag [#allocation3], %s574
        %s576 = sand.u32 %s60, 1
        %s577 = smul.addr %s576, 8
        %s578 = scalar_lea.vmem [#allocation2], %s577
        // Predicated region
        $region93: #{tpu_custom_call.1} parent=91 // pred_check
          %p579 = pneg %p73
        $region94: #{tpu_custom_call.1} parent=91 // pred_check_branch
          %581 = sbr.rel (%p579) target = $region96
        $region95: #{tpu_custom_call.1} parent=91 // pred_region
          %582 = dma.done %s575, 128
        $region96: #{tpu_custom_call.1} parent=91 // pred_fallthru
          _
        %s583 = sand.u32 %s86, 1
        %s584 = scalar_lea.sflag [#allocation6], %s583
        %s585 = sand.u32 %s86, 1
        %s586 = smul.addr %s585, 8
        %s587 = scalar_lea.vmem [#allocation5], %s586
        // Predicated region
        $region97: #{tpu_custom_call.1} parent=91 // pred_check
          %p588 = pneg %p99
        $region98: #{tpu_custom_call.1} parent=91 // pred_check_branch
          %590 = sbr.rel (%p588) target = $region100
        $region99: #{tpu_custom_call.1} parent=91 // pred_region
          %591 = dma.done %s584, 128
        $region100: #{tpu_custom_call.1} parent=91 // pred_fallthru
          _
        %s592 = sand.u32 %s60, 1
        %s593 = scalar_lea.sflag [#allocation3], %s592
        %s594 = sand.u32 %s60, 1
        %s595 = smul.addr %s594, 8
        %s596 = scalar_lea.vmem [#allocation2], %s595
        %p597 = pneg %p73
        %p598 = pneg %p70
        %s599 = sand.u32 %s86, 1
        %s600 = scalar_lea.sflag [#allocation6], %s599
        %s601 = sand.u32 %s86, 1
        %s602 = smul.addr %s601, 8
        %s603 = scalar_lea.vmem [#allocation5], %s602
        %p604 = pneg %p99
        %p605 = pneg %p96
        %p606 = pneg %p120
        %p607 = pneg %p117
        %p608 = pneg %p141
        %p609 = pneg %p138
        %p610 = pneg %p162
        %p611 = pneg %p159
        %p612 = pneg %p183
        %p613 = pneg %p180
        %p614 = pneg %p204
        %p615 = pneg %p201
        %p616 = pneg %p225
        %p617 = pneg %p222
        %p618 = pneg %p246
        %p619 = pneg %p243
        %p620 = pneg %p267
        %p621 = pneg %p264
        %p622 = pneg %p288
        %p623 = pneg %p285
        %p624 = pneg %p309
        %p625 = pneg %p306
        %p626 = pneg %p330
        %p627 = pneg %p327
        %p628 = pneg %p351
        %p629 = pneg %p348
        %p630 = pneg %p372
        %p631 = pneg %p369
        %p632 = pneg %p393
        %p633 = pneg %p390
        %p634 = pneg %p414
        %p635 = pneg %p411
        %p636 = pneg %p435
        %p637 = pneg %p432
        %p638 = pneg %p463
        %p639 = pneg %p460
        %s640 = sand.u32 %s450, 1
        %s641 = scalar_lea.sflag [#allocation4], %s640
        %s642 = sand.u32 %s450, 1
        %s643 = smul.addr %s642, 8
        %s644 = scalar_lea.vmem [#allocation7], %s643
        %v645 = vld [vmem:[%s578] sm:$0xff]
        %v646 = vld [vmem:[%s587] sm:$0xff]
        %v647 = vld [vmem:[%s2] sm:$0x1]
        %v648 = vld [vmem:[%s3] sm:$0x1]
        %vm649 = vcmask 261120
        %v650 = vsel %vm649, %v645, 0.0
        %651 = vadd.xlane.f32.xlu0 %v650
        %v652 = vpop.xlane.xlu0 %651
        %v653 = vrcp.pop 32.0
        %v654 = vmul.f32 %v652, %v653
        %v655 = vsub.f32 %v645, %v654
        %v656 = vmul.f32 %v655, %v655
        %v657 = vsel %vm649, %v656, 0.0
        %658 = vadd.xlane.f32.xlu0 %v657
        %v659 = vpop.xlane.xlu0 %658
        %v660 = vmul.f32 %v659, %v653
        %v661 = vadd.f32 %v660, 1e-05
        %v662 = vrsqrt.pop %v661
        %v663 = vmul.f32 %v655, %v662
        %v665 = vlaneseq
        %v666 = vshrl.u32 %v665, 7
        %v667 = vsub.s32 0, %v666
        %v668 = vrot.slane %v647, %v667
        %v670 = vmul.f32 %v663, %v668
        %v672 = vlaneseq
        %v673 = vshrl.u32 %v672, 7
        %v674 = vsub.s32 0, %v673
        %v675 = vrot.slane %v648, %v674
        %v677 = vadd.f32 %v670, %v675
        %v678 = vsel %vm649, %v646, 0.0
        %679 = vadd.xlane.f32.xlu0 %v678
        %v680 = vpop.xlane.xlu0 %679
        %v681 = vmul.f32 %v680, %v653
        %v682 = vsub.f32 %v646, %v681
        %v683 = vmul.f32 %v682, %v682
        %v684 = vsel %vm649, %v683, 0.0
        %685 = vadd.xlane.f32.xlu0 %v684
        %v686 = vpop.xlane.xlu0 %685
        %v687 = vmul.f32 %v686, %v653
        %v688 = vadd.f32 %v687, 1e-05
        %v689 = vrsqrt.pop %v688
        %v690 = vmul.f32 %v682, %v689
        %v691 = vmul.f32 %v690, %v668
        %v692 = vadd.f32 %v691, %v675
        %v693 = vld [vmem:[%s4] sm:$0xff]
        %v694 = vld [vmem:[%s4 + $0x8] sm:$0xff]
        %v695 = vld [vmem:[%s4 + $0x10] sm:$0xff]
        %v696 = vld [vmem:[%s4 + $0x18] sm:$0xff]
        %v697 = vld [vmem:[%s5] sm:$0x1]
        %v699 = vlaneseq
        %v700 = vshrl.u32 %v699, 7
        %v701 = vsub.s32 0, %v700
        %v702 = vrot.slane %v697, %v701
        %v705 = vsel %vm649, %v677, 0
        %707 = vmatprep.subr.mxu0 0.0
        %708 = vmatpush1.msra.mxu0 %v693
        %709 = vmatprep.subr.mxu0 0.0
        %710 = vmatpush1.msra.mxu0 %v694
        %711 = vmatprep.subr.mxu0 0.0
        %712 = vmatpush1.msra.mxu0 %v695
        %713 = vmatprep.subr.mxu0 0.0
        %714 = vmatpush1.msra.mxu0 %v696
        %715 = vmatprep.subr.mxu0 0.0
        %716 = vmatpush1.msra.mxu0 0.0
        %717 = vmatprep.subr.mxu0 0.0
        %718 = vmatpush1.msra.mxu0 0.0
        %719 = vmatprep.subr.mxu0 0.0
        %720 = vmatpush1.msra.mxu0 0.0
        %721 = vmatprep.subr.mxu0 0.0
        %722 = vmatpush1.msra.mxu0 0.0
        %723 = vmatprep.subr.mxu0 0.0
        %724 = vmatpush1.msra.mxu0 0.0
        %725 = vmatprep.subr.mxu0 0.0
        %726 = vmatpush1.msra.mxu0 0.0
        %727 = vmatprep.subr.mxu0 0.0
        %728 = vmatpush1.msra.mxu0 0.0
        %729 = vmatprep.subr.mxu0 0.0
        %730 = vmatpush1.msra.mxu0 0.0
        %731 = vmatprep.subr.mxu0 0.0
        %732 = vmatpush1.msra.mxu0 0.0
        %733 = vmatprep.subr.mxu0 0.0
        %734 = vmatpush1.msra.mxu0 0.0
        %735 = vmatprep.subr.mxu0 0.0
        %736 = vmatpush1.msra.mxu0 0.0
        %737 = vmatprep.subr.mxu0 0.0
        %738 = vmatpush1.msra.mxu0 0.0
        %739 = vmatprep.subr.mxu0 0.0
        %740 = vmatpush1.msra.mxu0 0.0
        %741 = vmatprep.subr.mxu0 0.0
        %742 = vmatpush1.msra.mxu0 0.0
        %743 = vmatprep.subr.mxu0 0.0
        %744 = vmatpush1.msra.mxu0 0.0
        %745 = vmatprep.subr.mxu0 0.0
        %746 = vmatpush1.msra.mxu0 0.0
        %747 = vmatprep.subr.mxu0 0.0
        %748 = vmatpush1.msra.mxu0 0.0
        %749 = vmatprep.subr.mxu0 0.0
        %750 = vmatpush1.msra.mxu0 0.0
        %751 = vmatprep.subr.mxu0 0.0
        %752 = vmatpush1.msra.mxu0 0.0
        %753 = vmatprep.subr.mxu0 0.0
        %754 = vmatpush1.msra.mxu0 0.0
        %755 = vmatprep.subr.mxu0 0.0
        %756 = vmatpush1.msra.mxu0 0.0
        %757 = vmatprep.subr.mxu0 0.0
        %758 = vmatpush1.msra.mxu0 0.0
        %759 = vmatprep.subr.mxu0 0.0
        %760 = vmatpush1.msra.mxu0 0.0
        %761 = vmatprep.subr.mxu0 0.0
        %762 = vmatpush1.msra.mxu0 0.0
        %763 = vmatprep.subr.mxu0 0.0
        %764 = vmatpush1.msra.mxu0 0.0
        %765 = vmatprep.subr.mxu0 0.0
        %766 = vmatpush1.msra.mxu0 0.0
        %767 = vmatprep.subr.mxu0 0.0
        %768 = vmatpush1.msra.mxu0 0.0
        %769 = vmatprep.subr.mxu0 0.0
        %770 = vmatpush1.msra.mxu0 0.0
        %771 = vmatprep.mubr.f32.mxu0 0.0
        %772 = vmatmul.mubr.f32.gmra.mrb[0].mxu0 %v705
        %v773 = vpop.f32.mrb[0].mxu0
        %v774 = vadd.f32 %v702, %v773
        %v775 = vpop.f32.mrb[0].mxu0
        %776 = vdwg.mxu0
        %v777 = vld [vmem:[%s6] sm:$0xff]
        %v778 = vld [vmem:[%s6 + $0x8] sm:$0xff]
        %v779 = vld [vmem:[%s6 + $0x10] sm:$0xff]
        %v780 = vld [vmem:[%s6 + $0x18] sm:$0xff]
        %v781 = vld [vmem:[%s7] sm:$0x1]
        %v783 = vlaneseq
        %v784 = vshrl.u32 %v783, 7
        %v785 = vsub.s32 0, %v784
        %v786 = vrot.slane %v781, %v785
        %v789 = vsel %vm649, %v692, 0
        %791 = vmatprep.subr.mxu0 0.0
        %792 = vmatpush1.msra.mxu0 %v777
        %793 = vmatprep.subr.mxu0 0.0
        %794 = vmatpush1.msra.mxu0 %v778
        %795 = vmatprep.subr.mxu0 0.0
        %796 = vmatpush1.msra.mxu0 %v779
        %797 = vmatprep.subr.mxu0 0.0
        %798 = vmatpush1.msra.mxu0 %v780
        %799 = vmatprep.subr.mxu0 0.0
        %800 = vmatpush1.msra.mxu0 0.0
        %801 = vmatprep.subr.mxu0 0.0
        %802 = vmatpush1.msra.mxu0 0.0
        %803 = vmatprep.subr.mxu0 0.0
        %804 = vmatpush1.msra.mxu0 0.0
        %805 = vmatprep.subr.mxu0 0.0
        %806 = vmatpush1.msra.mxu0 0.0
        %807 = vmatprep.subr.mxu0 0.0
        %808 = vmatpush1.msra.mxu0 0.0
        %809 = vmatprep.subr.mxu0 0.0
        %810 = vmatpush1.msra.mxu0 0.0
        %811 = vmatprep.subr.mxu0 0.0
        %812 = vmatpush1.msra.mxu0 0.0
        %813 = vmatprep.subr.mxu0 0.0
        %814 = vmatpush1.msra.mxu0 0.0
        %815 = vmatprep.subr.mxu0 0.0
        %816 = vmatpush1.msra.mxu0 0.0
        %817 = vmatprep.subr.mxu0 0.0
        %818 = vmatpush1.msra.mxu0 0.0
        %819 = vmatprep.subr.mxu0 0.0
        %820 = vmatpush1.msra.mxu0 0.0
        %821 = vmatprep.subr.mxu0 0.0
        %822 = vmatpush1.msra.mxu0 0.0
        %823 = vmatprep.subr.mxu0 0.0
        %824 = vmatpush1.msra.mxu0 0.0
        %825 = vmatprep.subr.mxu0 0.0
        %826 = vmatpush1.msra.mxu0 0.0
        %827 = vmatprep.subr.mxu0 0.0
        %828 = vmatpush1.msra.mxu0 0.0
        %829 = vmatprep.subr.mxu0 0.0
        %830 = vmatpush1.msra.mxu0 0.0
        %831 = vmatprep.subr.mxu0 0.0
        %832 = vmatpush1.msra.mxu0 0.0
        %833 = vmatprep.subr.mxu0 0.0
        %834 = vmatpush1.msra.mxu0 0.0
        %835 = vmatprep.subr.mxu0 0.0
        %836 = vmatpush1.msra.mxu0 0.0
        %837 = vmatprep.subr.mxu0 0.0
        %838 = vmatpush1.msra.mxu0 0.0
        %839 = vmatprep.subr.mxu0 0.0
        %840 = vmatpush1.msra.mxu0 0.0
        %841 = vmatprep.subr.mxu0 0.0
        %842 = vmatpush1.msra.mxu0 0.0
        %843 = vmatprep.subr.mxu0 0.0
        %844 = vmatpush1.msra.mxu0 0.0
        %845 = vmatprep.subr.mxu0 0.0
        %846 = vmatpush1.msra.mxu0 0.0
        %847 = vmatprep.subr.mxu0 0.0
        %848 = vmatpush1.msra.mxu0 0.0
        %849 = vmatprep.subr.mxu0 0.0
        %850 = vmatpush1.msra.mxu0 0.0
        %851 = vmatprep.subr.mxu0 0.0
        %852 = vmatpush1.msra.mxu0 0.0
        %853 = vmatprep.subr.mxu0 0.0
        %854 = vmatpush1.msra.mxu0 0.0
        %855 = vmatprep.mubr.f32.mxu0 0.0
        %856 = vmatmul.mubr.f32.gmra.mrb[0].mxu0 %v789
        %v857 = vpop.f32.mrb[0].mxu0
        %v858 = vadd.f32 %v786, %v857
        %v859 = vpop.f32.mrb[0].mxu0
        %860 = vdwg.mxu0
        %v861 = vld [vmem:[%s8] sm:$0xff]
        %v862 = vld [vmem:[%s8 + $0x8] sm:$0xff]
        %v863 = vld [vmem:[%s8 + $0x10] sm:$0xff]
        %v864 = vld [vmem:[%s8 + $0x18] sm:$0xff]
        %v865 = vld [vmem:[%s9] sm:$0x1]
        %v867 = vlaneseq
        %v868 = vshrl.u32 %v867, 7
        %v869 = vsub.s32 0, %v868
        %v870 = vrot.slane %v865, %v869
        %872 = vmatprep.subr.mxu0 0.0
        %873 = vmatpush1.msra.mxu0 %v861
        %874 = vmatprep.subr.mxu0 0.0
        %875 = vmatpush1.msra.mxu0 %v862
        %876 = vmatprep.subr.mxu0 0.0
        %877 = vmatpush1.msra.mxu0 %v863
        %878 = vmatprep.subr.mxu0 0.0
        %879 = vmatpush1.msra.mxu0 %v864
        %880 = vmatprep.subr.mxu0 0.0
        %881 = vmatpush1.msra.mxu0 0.0
        %882 = vmatprep.subr.mxu0 0.0
        %883 = vmatpush1.msra.mxu0 0.0
        %884 = vmatprep.subr.mxu0 0.0
        %885 = vmatpush1.msra.mxu0 0.0
        %886 = vmatprep.subr.mxu0 0.0
        %887 = vmatpush1.msra.mxu0 0.0
        %888 = vmatprep.subr.mxu0 0.0
        %889 = vmatpush1.msra.mxu0 0.0
        %890 = vmatprep.subr.mxu0 0.0
        %891 = vmatpush1.msra.mxu0 0.0
        %892 = vmatprep.subr.mxu0 0.0
        %893 = vmatpush1.msra.mxu0 0.0
        %894 = vmatprep.subr.mxu0 0.0
        %895 = vmatpush1.msra.mxu0 0.0
        %896 = vmatprep.subr.mxu0 0.0
        %897 = vmatpush1.msra.mxu0 0.0
        %898 = vmatprep.subr.mxu0 0.0
        %899 = vmatpush1.msra.mxu0 0.0
        %900 = vmatprep.subr.mxu0 0.0
        %901 = vmatpush1.msra.mxu0 0.0
        %902 = vmatprep.subr.mxu0 0.0
        %903 = vmatpush1.msra.mxu0 0.0
        %904 = vmatprep.subr.mxu0 0.0
        %905 = vmatpush1.msra.mxu0 0.0
        %906 = vmatprep.subr.mxu0 0.0
        %907 = vmatpush1.msra.mxu0 0.0
        %908 = vmatprep.subr.mxu0 0.0
        %909 = vmatpush1.msra.mxu0 0.0
        %910 = vmatprep.subr.mxu0 0.0
        %911 = vmatpush1.msra.mxu0 0.0
        %912 = vmatprep.subr.mxu0 0.0
        %913 = vmatpush1.msra.mxu0 0.0
        %914 = vmatprep.subr.mxu0 0.0
        %915 = vmatpush1.msra.mxu0 0.0
        %916 = vmatprep.subr.mxu0 0.0
        %917 = vmatpush1.msra.mxu0 0.0
        %918 = vmatprep.subr.mxu0 0.0
        %919 = vmatpush1.msra.mxu0 0.0
        %920 = vmatprep.subr.mxu0 0.0
        %921 = vmatpush1.msra.mxu0 0.0
        %922 = vmatprep.subr.mxu0 0.0
        %923 = vmatpush1.msra.mxu0 0.0
        %924 = vmatprep.subr.mxu0 0.0
        %925 = vmatpush1.msra.mxu0 0.0
        %926 = vmatprep.subr.mxu0 0.0
        %927 = vmatpush1.msra.mxu0 0.0
        %928 = vmatprep.subr.mxu0 0.0
        %929 = vmatpush1.msra.mxu0 0.0
        %930 = vmatprep.subr.mxu0 0.0
        %931 = vmatpush1.msra.mxu0 0.0
        %932 = vmatprep.subr.mxu0 0.0
        %933 = vmatpush1.msra.mxu0 0.0
        %934 = vmatprep.subr.mxu0 0.0
        %935 = vmatpush1.msra.mxu0 0.0
        %936 = vmatprep.mubr.f32.mxu0 0.0
        %937 = vmatmul.mubr.f32.gmra.mrb[0].mxu0 %v789
        %v938 = vpop.f32.mrb[0].mxu0
        %v939 = vadd.f32 %v870, %v938
        %v940 = vpop.f32.mrb[0].mxu0
        %941 = vdwg.mxu0
        %s942 = smul.u32 %s43, 8
        %v943 = vlaneseq
        %v944 = vshrl.u32 %v943, 7
        %v945 = vstv %s942
        %v946 = vadd.s32 %v945, %v944
        %v947 = vlaneseq
        %v948 = vand.u32 %v947, 127
        %vm949 = vcmp.le.s32.totalorder %v948, %v946
        %vm950 = vcmask 64512
        %v952 = vsel %vm950, %v774, 0
        %v955 = vsel %vm950, %v858, 0
        %957 = vmatprep.subr.mxu0 0.0
        %958 = vmatpush1.xpose.msra.mxu0 %v955
        %959 = vmatprep.subr.mxu0 0.0
        %960 = vmatpush1.xpose.msra.mxu0 0.0
        %961 = vmatprep.subr.mxu0 0.0
        %962 = vmatpush1.xpose.msra.mxu0 0.0
        %963 = vmatprep.subr.mxu0 0.0
        %964 = vmatpush1.xpose.msra.mxu0 0.0
        %965 = vmatprep.subr.mxu0 0.0
        %966 = vmatpush1.xpose.msra.mxu0 0.0
        %967 = vmatprep.subr.mxu0 0.0
        %968 = vmatpush1.xpose.msra.mxu0 0.0
        %969 = vmatprep.subr.mxu0 0.0
        %970 = vmatpush1.xpose.msra.mxu0 0.0
        %971 = vmatprep.subr.mxu0 0.0
        %972 = vmatpush1.xpose.msra.mxu0 0.0
        %973 = vmatprep.subr.mxu0 0.0
        %974 = vmatpush1.xpose.msra.mxu0 0.0
        %975 = vmatprep.subr.mxu0 0.0
        %976 = vmatpush1.xpose.msra.mxu0 0.0
        %977 = vmatprep.subr.mxu0 0.0
        %978 = vmatpush1.xpose.msra.mxu0 0.0
        %979 = vmatprep.subr.mxu0 0.0
        %980 = vmatpush1.xpose.msra.mxu0 0.0
        %981 = vmatprep.subr.mxu0 0.0
        %982 = vmatpush1.xpose.msra.mxu0 0.0
        %983 = vmatprep.subr.mxu0 0.0
        %984 = vmatpush1.xpose.msra.mxu0 0.0
        %985 = vmatprep.subr.mxu0 0.0
        %986 = vmatpush1.xpose.msra.mxu0 0.0
        %987 = vmatprep.subr.mxu0 0.0
        %988 = vmatpush1.xpose.msra.mxu0 0.0
        %989 = vmatprep.subr.mxu0 0.0
        %990 = vmatpush1.xpose.msra.mxu0 0.0
        %991 = vmatprep.subr.mxu0 0.0
        %992 = vmatpush1.xpose.msra.mxu0 0.0
        %993 = vmatprep.subr.mxu0 0.0
        %994 = vmatpush1.xpose.msra.mxu0 0.0
        %995 = vmatprep.subr.mxu0 0.0
        %996 = vmatpush1.xpose.msra.mxu0 0.0
        %997 = vmatprep.subr.mxu0 0.0
        %998 = vmatpush1.xpose.msra.mxu0 0.0
        %999 = vmatprep.subr.mxu0 0.0
        %1000 = vmatpush1.xpose.msra.mxu0 0.0
        %1001 = vmatprep.subr.mxu0 0.0
        %1002 = vmatpush1.xpose.msra.mxu0 0.0
        %1003 = vmatprep.subr.mxu0 0.0
        %1004 = vmatpush1.xpose.msra.mxu0 0.0
        %1005 = vmatprep.subr.mxu0 0.0
        %1006 = vmatpush1.xpose.msra.mxu0 0.0
        %1007 = vmatprep.subr.mxu0 0.0
        %1008 = vmatpush1.xpose.msra.mxu0 0.0
        %1009 = vmatprep.subr.mxu0 0.0
        %1010 = vmatpush1.xpose.msra.mxu0 0.0
        %1011 = vmatprep.subr.mxu0 0.0
        %1012 = vmatpush1.xpose.msra.mxu0 0.0
        %1013 = vmatprep.subr.mxu0 0.0
        %1014 = vmatpush1.xpose.msra.mxu0 0.0
        %1015 = vmatprep.subr.mxu0 0.0
        %1016 = vmatpush1.xpose.msra.mxu0 0.0
        %1017 = vmatprep.subr.mxu0 0.0
        %1018 = vmatpush1.xpose.msra.mxu0 0.0
        %1019 = vmatprep.subr.mxu0 0.0
        %1020 = vmatpush1.xpose.msra.mxu0 0.0
        %1021 = vmatprep.mubr.f32.mxu0 0.0
        %1022 = vmatmul.mubr.f32.gmra.mrb[0].mxu0 %v952
        %v1023 = vpop.f32.mrb[0].mxu0
        %v1024 = vadd.f32 0.0, %v1023
        %v1025 = vpop.f32.mrb[0].mxu0
        %1026 = vdwg.mxu0
        %v1027 = vmul.f32 %v1024, 0.35355338
        %v1028 = vsel %vm949, %v1027, -1e+30
        %v1029 = vsel %vm950, %v1028, -inf
        %1030 = vmax.xlane.f32.xlu0 %v1029
        %v1031 = vpop.xlane.xlu0 %1030
        %v1032 = vsub.f32 %v1028, %v1031
        %v1033 = vmul.f32 %v1032, 1.442695
        %v1034 = vpow.pop %v1033
        %v1035 = vsel %vm950, %v1034, 0.0
        %1036 = vadd.xlane.f32.xlu0 %v1035
        %v1037 = vpop.xlane.xlu0 %1036
        %v1038 = vrcp.pop %v1037
        %v1039 = vmul.f32 %v1034, %v1038
        %v1041 = vsel %vm950, %v1039, 0
        %1043 = vmatprep.subr.mxu0 0.0
        %1044 = vmatpush1.msra.mxu0 %v939
        %1045 = vmatprep.subr.mxu0 0.0
        %1046 = vmatpush1.msra.mxu0 0.0
        %1047 = vmatprep.subr.mxu0 0.0
        %1048 = vmatpush1.msra.mxu0 0.0
        %1049 = vmatprep.subr.mxu0 0.0
        %1050 = vmatpush1.msra.mxu0 0.0
        %1051 = vmatprep.subr.mxu0 0.0
        %1052 = vmatpush1.msra.mxu0 0.0
        %1053 = vmatprep.subr.mxu0 0.0
        %1054 = vmatpush1.msra.mxu0 0.0
        %1055 = vmatprep.subr.mxu0 0.0
        %1056 = vmatpush1.msra.mxu0 0.0
        %1057 = vmatprep.subr.mxu0 0.0
        %1058 = vmatpush1.msra.mxu0 0.0
        %1059 = vmatprep.subr.mxu0 0.0
        %1060 = vmatpush1.msra.mxu0 0.0
        %1061 = vmatprep.subr.mxu0 0.0
        %1062 = vmatpush1.msra.mxu0 0.0
        %1063 = vmatprep.subr.mxu0 0.0
        %1064 = vmatpush1.msra.mxu0 0.0
        %1065 = vmatprep.subr.mxu0 0.0
        %1066 = vmatpush1.msra.mxu0 0.0
        %1067 = vmatprep.subr.mxu0 0.0
        %1068 = vmatpush1.msra.mxu0 0.0
        %1069 = vmatprep.subr.mxu0 0.0
        %1070 = vmatpush1.msra.mxu0 0.0
        %1071 = vmatprep.subr.mxu0 0.0
        %1072 = vmatpush1.msra.mxu0 0.0
        %1073 = vmatprep.subr.mxu0 0.0
        %1074 = vmatpush1.msra.mxu0 0.0
        %1075 = vmatprep.subr.mxu0 0.0
        %1076 = vmatpush1.msra.mxu0 0.0
        %1077 = vmatprep.subr.mxu0 0.0
        %1078 = vmatpush1.msra.mxu0 0.0
        %1079 = vmatprep.subr.mxu0 0.0
        %1080 = vmatpush1.msra.mxu0 0.0
        %1081 = vmatprep.subr.mxu0 0.0
        %1082 = vmatpush1.msra.mxu0 0.0
        %1083 = vmatprep.subr.mxu0 0.0
        %1084 = vmatpush1.msra.mxu0 0.0
        %1085 = vmatprep.subr.mxu0 0.0
        %1086 = vmatpush1.msra.mxu0 0.0
        %1087 = vmatprep.subr.mxu0 0.0
        %1088 = vmatpush1.msra.mxu0 0.0
        %1089 = vmatprep.subr.mxu0 0.0
        %1090 = vmatpush1.msra.mxu0 0.0
        %1091 = vmatprep.subr.mxu0 0.0
        %1092 = vmatpush1.msra.mxu0 0.0
        %1093 = vmatprep.subr.mxu0 0.0
        %1094 = vmatpush1.msra.mxu0 0.0
        %1095 = vmatprep.subr.mxu0 0.0
        %1096 = vmatpush1.msra.mxu0 0.0
        %1097 = vmatprep.subr.mxu0 0.0
        %1098 = vmatpush1.msra.mxu0 0.0
        %1099 = vmatprep.subr.mxu0 0.0
        %1100 = vmatpush1.msra.mxu0 0.0
        %1101 = vmatprep.subr.mxu0 0.0
        %1102 = vmatpush1.msra.mxu0 0.0
        %1103 = vmatprep.subr.mxu0 0.0
        %1104 = vmatpush1.msra.mxu0 0.0
        %1105 = vmatprep.subr.mxu0 0.0
        %1106 = vmatpush1.msra.mxu0 0.0
        %1107 = vmatprep.mubr.f32.mxu0 0.0
        %1108 = vmatmul.mubr.f32.gmra.mrb[0].mxu0 %v1041
        %v1109 = vpop.f32.mrb[0].mxu0
        %v1110 = vadd.f32 0.0, %v1109
        %v1111 = vpop.f32.mrb[0].mxu0
        %1112 = vdwg.mxu0
        %v1113 = vld [vmem:[%s10] sm:$0xff]
        %1114 = vrot.lane.b32.xlu0 %v774, 120
        %v1115 = vpop.permute.xlu0 %1114
        %1116 = vrot.lane.b32.xlu0 %v858, 120
        %v1117 = vpop.permute.xlu0 %1116
        %v1118 = vsel %vm950, %v1115, 0
        %v1120 = vsel %vm950, %v1117, 0
        %1122 = vmatprep.subr.mxu0 0.0
        %1123 = vmatpush1.xpose.msra.mxu0 %v1120
        %1124 = vmatprep.subr.mxu0 0.0
        %1125 = vmatpush1.xpose.msra.mxu0 0.0
        %1126 = vmatprep.subr.mxu0 0.0
        %1127 = vmatpush1.xpose.msra.mxu0 0.0
        %1128 = vmatprep.subr.mxu0 0.0
        %1129 = vmatpush1.xpose.msra.mxu0 0.0
        %1130 = vmatprep.subr.mxu0 0.0
        %1131 = vmatpush1.xpose.msra.mxu0 0.0
        %1132 = vmatprep.subr.mxu0 0.0
        %1133 = vmatpush1.xpose.msra.mxu0 0.0
        %1134 = vmatprep.subr.mxu0 0.0
        %1135 = vmatpush1.xpose.msra.mxu0 0.0
        %1136 = vmatprep.subr.mxu0 0.0
        %1137 = vmatpush1.xpose.msra.mxu0 0.0
        %1138 = vmatprep.subr.mxu0 0.0
        %1139 = vmatpush1.xpose.msra.mxu0 0.0
        %1140 = vmatprep.subr.mxu0 0.0
        %1141 = vmatpush1.xpose.msra.mxu0 0.0
        %1142 = vmatprep.subr.mxu0 0.0
        %1143 = vmatpush1.xpose.msra.mxu0 0.0
        %1144 = vmatprep.subr.mxu0 0.0
        %1145 = vmatpush1.xpose.msra.mxu0 0.0
        %1146 = vmatprep.subr.mxu0 0.0
        %1147 = vmatpush1.xpose.msra.mxu0 0.0
        %1148 = vmatprep.subr.mxu0 0.0
        %1149 = vmatpush1.xpose.msra.mxu0 0.0
        %1150 = vmatprep.subr.mxu0 0.0
        %1151 = vmatpush1.xpose.msra.mxu0 0.0
        %1152 = vmatprep.subr.mxu0 0.0
        %1153 = vmatpush1.xpose.msra.mxu0 0.0
        %1154 = vmatprep.subr.mxu0 0.0
        %1155 = vmatpush1.xpose.msra.mxu0 0.0
        %1156 = vmatprep.subr.mxu0 0.0
        %1157 = vmatpush1.xpose.msra.mxu0 0.0
        %1158 = vmatprep.subr.mxu0 0.0
        %1159 = vmatpush1.xpose.msra.mxu0 0.0
        %1160 = vmatprep.subr.mxu0 0.0
        %1161 = vmatpush1.xpose.msra.mxu0 0.0
        %1162 = vmatprep.subr.mxu0 0.0
        %1163 = vmatpush1.xpose.msra.mxu0 0.0
        %1164 = vmatprep.subr.mxu0 0.0
        %1165 = vmatpush1.xpose.msra.mxu0 0.0
        %1166 = vmatprep.subr.mxu0 0.0
        %1167 = vmatpush1.xpose.msra.mxu0 0.0
        %1168 = vmatprep.subr.mxu0 0.0
        %1169 = vmatpush1.xpose.msra.mxu0 0.0
        %1170 = vmatprep.subr.mxu0 0.0
        %1171 = vmatpush1.xpose.msra.mxu0 0.0
        %1172 = vmatprep.subr.mxu0 0.0
        %1173 = vmatpush1.xpose.msra.mxu0 0.0
        %1174 = vmatprep.subr.mxu0 0.0
        %1175 = vmatpush1.xpose.msra.mxu0 0.0
        %1176 = vmatprep.subr.mxu0 0.0
        %1177 = vmatpush1.xpose.msra.mxu0 0.0
        %1178 = vmatprep.subr.mxu0 0.0
        %1179 = vmatpush1.xpose.msra.mxu0 0.0
        %1180 = vmatprep.subr.mxu0 0.0
        %1181 = vmatpush1.xpose.msra.mxu0 0.0
        %1182 = vmatprep.subr.mxu0 0.0
        %1183 = vmatpush1.xpose.msra.mxu0 0.0
        %1184 = vmatprep.subr.mxu0 0.0
        %1185 = vmatpush1.xpose.msra.mxu0 0.0
        %1186 = vmatprep.mubr.f32.mxu0 0.0
        %1187 = vmatmul.mubr.f32.gmra.mrb[0].mxu0 %v1118
        %v1188 = vpop.f32.mrb[0].mxu0
        %v1189 = vadd.f32 0.0, %v1188
        %v1190 = vpop.f32.mrb[0].mxu0
        %1191 = vdwg.mxu0
        %v1192 = vmul.f32 %v1189, 0.35355338
        %v1193 = vsel %vm949, %v1192, -1e+30
        %v1194 = vsel %vm950, %v1193, -inf
        %1195 = vmax.xlane.f32.xlu0 %v1194
        %v1196 = vpop.xlane.xlu0 %1195
        %v1197 = vsub.f32 %v1193, %v1196
        %v1198 = vmul.f32 %v1197, 1.442695
        %v1199 = vpow.pop %v1198
        %v1200 = vsel %vm950, %v1199, 0.0
        %1201 = vadd.xlane.f32.xlu0 %v1200
        %v1202 = vpop.xlane.xlu0 %1201
        %v1203 = vrcp.pop %v1202
        %v1204 = vmul.f32 %v1199, %v1203
        %1206 = vrot.lane.b32.xlu0 %v939, 120
        %v1207 = vpop.permute.xlu0 %1206
        %v1210 = vsel %vm950, %v1204, 0
        %1212 = vmatprep.subr.mxu0 0.0
        %1213 = vmatpush1.msra.mxu0 %v1207
        %1214 = vmatprep.subr.mxu0 0.0
        %1215 = vmatpush1.msra.mxu0 0.0
        %1216 = vmatprep.subr.mxu0 0.0
        %1217 = vmatpush1.msra.mxu0 0.0
        %1218 = vmatprep.subr.mxu0 0.0
        %1219 = vmatpush1.msra.mxu0 0.0
        %1220 = vmatprep.subr.mxu0 0.0
        %1221 = vmatpush1.msra.mxu0 0.0
        %1222 = vmatprep.subr.mxu0 0.0
        %1223 = vmatpush1.msra.mxu0 0.0
        %1224 = vmatprep.subr.mxu0 0.0
        %1225 = vmatpush1.msra.mxu0 0.0
        %1226 = vmatprep.subr.mxu0 0.0
        %1227 = vmatpush1.msra.mxu0 0.0
        %1228 = vmatprep.subr.mxu0 0.0
        %1229 = vmatpush1.msra.mxu0 0.0
        %1230 = vmatprep.subr.mxu0 0.0
        %1231 = vmatpush1.msra.mxu0 0.0
        %1232 = vmatprep.subr.mxu0 0.0
        %1233 = vmatpush1.msra.mxu0 0.0
        %1234 = vmatprep.subr.mxu0 0.0
        %1235 = vmatpush1.msra.mxu0 0.0
        %1236 = vmatprep.subr.mxu0 0.0
        %1237 = vmatpush1.msra.mxu0 0.0
        %1238 = vmatprep.subr.mxu0 0.0
        %1239 = vmatpush1.msra.mxu0 0.0
        %1240 = vmatprep.subr.mxu0 0.0
        %1241 = vmatpush1.msra.mxu0 0.0
        %1242 = vmatprep.subr.mxu0 0.0
        %1243 = vmatpush1.msra.mxu0 0.0
        %1244 = vmatprep.subr.mxu0 0.0
        %1245 = vmatpush1.msra.mxu0 0.0
        %1246 = vmatprep.subr.mxu0 0.0
        %1247 = vmatpush1.msra.mxu0 0.0
        %1248 = vmatprep.subr.mxu0 0.0
        %1249 = vmatpush1.msra.mxu0 0.0
        %1250 = vmatprep.subr.mxu0 0.0
        %1251 = vmatpush1.msra.mxu0 0.0
        %1252 = vmatprep.subr.mxu0 0.0
        %1253 = vmatpush1.msra.mxu0 0.0
        %1254 = vmatprep.subr.mxu0 0.0
        %1255 = vmatpush1.msra.mxu0 0.0
        %1256 = vmatprep.subr.mxu0 0.0
        %1257 = vmatpush1.msra.mxu0 0.0
        %1258 = vmatprep.subr.mxu0 0.0
        %1259 = vmatpush1.msra.mxu0 0.0
        %1260 = vmatprep.subr.mxu0 0.0
        %1261 = vmatpush1.msra.mxu0 0.0
        %1262 = vmatprep.subr.mxu0 0.0
        %1263 = vmatpush1.msra.mxu0 0.0
        %1264 = vmatprep.subr.mxu0 0.0
        %1265 = vmatpush1.msra.mxu0 0.0
        %1266 = vmatprep.subr.mxu0 0.0
        %1267 = vmatpush1.msra.mxu0 0.0
        %1268 = vmatprep.subr.mxu0 0.0
        %1269 = vmatpush1.msra.mxu0 0.0
        %1270 = vmatprep.subr.mxu0 0.0
        %1271 = vmatpush1.msra.mxu0 0.0
        %1272 = vmatprep.subr.mxu0 0.0
        %1273 = vmatpush1.msra.mxu0 0.0
        %1274 = vmatprep.subr.mxu0 0.0
        %1275 = vmatpush1.msra.mxu0 0.0
        %1276 = vmatprep.mubr.f32.mxu0 0.0
        %1277 = vmatmul.mubr.f32.gmra.mrb[0].mxu0 %v1210
        %v1278 = vpop.f32.mrb[0].mxu0
        %v1279 = vadd.f32 0.0, %v1278
        %v1280 = vpop.f32.mrb[0].mxu0
        %1281 = vdwg.mxu0
        %v1282 = vld [vmem:[%s10 + $0x8] sm:$0xff]
        %v1284 = vsel %vm950, %v1279, 0
        %1286 = vmatprep.subr.mxu0 0.0
        %1287 = vmatpush1.msra.mxu0 %v1282
        %1288 = vmatprep.subr.mxu0 0.0
        %1289 = vmatpush1.msra.mxu0 0.0
        %1290 = vmatprep.subr.mxu0 0.0
        %1291 = vmatpush1.msra.mxu0 0.0
        %1292 = vmatprep.subr.mxu0 0.0
        %1293 = vmatpush1.msra.mxu0 0.0
        %1294 = vmatprep.subr.mxu0 0.0
        %1295 = vmatpush1.msra.mxu0 0.0
        %1296 = vmatprep.subr.mxu0 0.0
        %1297 = vmatpush1.msra.mxu0 0.0
        %1298 = vmatprep.subr.mxu0 0.0
        %1299 = vmatpush1.msra.mxu0 0.0
        %1300 = vmatprep.subr.mxu0 0.0
        %1301 = vmatpush1.msra.mxu0 0.0
        %1302 = vmatprep.subr.mxu0 0.0
        %1303 = vmatpush1.msra.mxu0 0.0
        %1304 = vmatprep.subr.mxu0 0.0
        %1305 = vmatpush1.msra.mxu0 0.0
        %1306 = vmatprep.subr.mxu0 0.0
        %1307 = vmatpush1.msra.mxu0 0.0
        %1308 = vmatprep.subr.mxu0 0.0
        %1309 = vmatpush1.msra.mxu0 0.0
        %1310 = vmatprep.subr.mxu0 0.0
        %1311 = vmatpush1.msra.mxu0 0.0
        %1312 = vmatprep.subr.mxu0 0.0
        %1313 = vmatpush1.msra.mxu0 0.0
        %1314 = vmatprep.subr.mxu0 0.0
        %1315 = vmatpush1.msra.mxu0 0.0
        %1316 = vmatprep.subr.mxu0 0.0
        %1317 = vmatpush1.msra.mxu0 0.0
        %1318 = vmatprep.subr.mxu0 0.0
        %1319 = vmatpush1.msra.mxu0 0.0
        %1320 = vmatprep.subr.mxu0 0.0
        %1321 = vmatpush1.msra.mxu0 0.0
        %1322 = vmatprep.subr.mxu0 0.0
        %1323 = vmatpush1.msra.mxu0 0.0
        %1324 = vmatprep.subr.mxu0 0.0
        %1325 = vmatpush1.msra.mxu0 0.0
        %1326 = vmatprep.subr.mxu0 0.0
        %1327 = vmatpush1.msra.mxu0 0.0
        %1328 = vmatprep.subr.mxu0 0.0
        %1329 = vmatpush1.msra.mxu0 0.0
        %1330 = vmatprep.subr.mxu0 0.0
        %1331 = vmatpush1.msra.mxu0 0.0
        %1332 = vmatprep.subr.mxu0 0.0
        %1333 = vmatpush1.msra.mxu0 0.0
        %1334 = vmatprep.subr.mxu0 0.0
        %1335 = vmatpush1.msra.mxu0 0.0
        %1336 = vmatprep.subr.mxu0 0.0
        %1337 = vmatpush1.msra.mxu0 0.0
        %1338 = vmatprep.subr.mxu0 0.0
        %1339 = vmatpush1.msra.mxu0 0.0
        %1340 = vmatprep.subr.mxu0 0.0
        %1341 = vmatpush1.msra.mxu0 0.0
        %1342 = vmatprep.subr.mxu0 0.0
        %1343 = vmatpush1.msra.mxu0 0.0
        %1344 = vmatprep.subr.mxu0 0.0
        %1345 = vmatpush1.msra.mxu0 0.0
        %1346 = vmatprep.subr.mxu0 0.0
        %1347 = vmatpush1.msra.mxu0 0.0
        %1348 = vmatprep.subr.mxu0 0.0
        %1349 = vmatpush1.msra.mxu0 0.0
        %1350 = vmatprep.mubr.f32.mxu0 0.0
        %1351 = vmatmul.mubr.f32.gmra.mrb[0].mxu0 %v1284
        %v1352 = vpop.f32.mrb[0].mxu0
        %v1353 = vadd.f32 0.0, %v1352
        %v1354 = vpop.f32.mrb[0].mxu0
        %1355 = vdwg.mxu0
        %v1357 = vsel %vm950, %v1110, 0
        %1359 = vmatprep.subr.mxu0 0.0
        %1360 = vmatpush1.msra.mxu0 %v1113
        %1361 = vmatprep.subr.mxu0 0.0
        %1362 = vmatpush1.msra.mxu0 0.0
        %1363 = vmatprep.subr.mxu0 0.0
        %1364 = vmatpush1.msra.mxu0 0.0
        %1365 = vmatprep.subr.mxu0 0.0
        %1366 = vmatpush1.msra.mxu0 0.0
        %1367 = vmatprep.subr.mxu0 0.0
        %1368 = vmatpush1.msra.mxu0 0.0
        %1369 = vmatprep.subr.mxu0 0.0
        %1370 = vmatpush1.msra.mxu0 0.0
        %1371 = vmatprep.subr.mxu0 0.0
        %1372 = vmatpush1.msra.mxu0 0.0
        %1373 = vmatprep.subr.mxu0 0.0
        %1374 = vmatpush1.msra.mxu0 0.0
        %1375 = vmatprep.subr.mxu0 0.0
        %1376 = vmatpush1.msra.mxu0 0.0
        %1377 = vmatprep.subr.mxu0 0.0
        %1378 = vmatpush1.msra.mxu0 0.0
        %1379 = vmatprep.subr.mxu0 0.0
        %1380 = vmatpush1.msra.mxu0 0.0
        %1381 = vmatprep.subr.mxu0 0.0
        %1382 = vmatpush1.msra.mxu0 0.0
        %1383 = vmatprep.subr.mxu0 0.0
        %1384 = vmatpush1.msra.mxu0 0.0
        %1385 = vmatprep.subr.mxu0 0.0
        %1386 = vmatpush1.msra.mxu0 0.0
        %1387 = vmatprep.subr.mxu0 0.0
        %1388 = vmatpush1.msra.mxu0 0.0
        %1389 = vmatprep.subr.mxu0 0.0
        %1390 = vmatpush1.msra.mxu0 0.0
        %1391 = vmatprep.subr.mxu0 0.0
        %1392 = vmatpush1.msra.mxu0 0.0
        %1393 = vmatprep.subr.mxu0 0.0
        %1394 = vmatpush1.msra.mxu0 0.0
        %1395 = vmatprep.subr.mxu0 0.0
        %1396 = vmatpush1.msra.mxu0 0.0
        %1397 = vmatprep.subr.mxu0 0.0
        %1398 = vmatpush1.msra.mxu0 0.0
        %1399 = vmatprep.subr.mxu0 0.0
        %1400 = vmatpush1.msra.mxu0 0.0
        %1401 = vmatprep.subr.mxu0 0.0
        %1402 = vmatpush1.msra.mxu0 0.0
        %1403 = vmatprep.subr.mxu0 0.0
        %1404 = vmatpush1.msra.mxu0 0.0
        %1405 = vmatprep.subr.mxu0 0.0
        %1406 = vmatpush1.msra.mxu0 0.0
        %1407 = vmatprep.subr.mxu0 0.0
        %1408 = vmatpush1.msra.mxu0 0.0
        %1409 = vmatprep.subr.mxu0 0.0
        %1410 = vmatpush1.msra.mxu0 0.0
        %1411 = vmatprep.subr.mxu0 0.0
        %1412 = vmatpush1.msra.mxu0 0.0
        %1413 = vmatprep.subr.mxu0 0.0
        %1414 = vmatpush1.msra.mxu0 0.0
        %1415 = vmatprep.subr.mxu0 0.0
        %1416 = vmatpush1.msra.mxu0 0.0
        %1417 = vmatprep.subr.mxu0 0.0
        %1418 = vmatpush1.msra.mxu0 0.0
        %1419 = vmatprep.subr.mxu0 0.0
        %1420 = vmatpush1.msra.mxu0 0.0
        %1421 = vmatprep.subr.mxu0 0.0
        %1422 = vmatpush1.msra.mxu0 0.0
        %1423 = vmatprep.mubr.f32.mxu0 0.0
        %1424 = vmatmul.mubr.f32.gmra.mrb[0].mxu0 %v1357
        %v1425 = vpop.f32.mrb[0].mxu0
        %v1426 = vadd.f32 %v1353, %v1425
        %v1427 = vpop.f32.mrb[0].mxu0
        %1428 = vdwg.mxu0
        %1429 = vrot.lane.b32.xlu0 %v774, 112
        %v1430 = vpop.permute.xlu0 %1429
        %1431 = vrot.lane.b32.xlu0 %v858, 112
        %v1432 = vpop.permute.xlu0 %1431
        %v1433 = vsel %vm950, %v1430, 0
        %v1435 = vsel %vm950, %v1432, 0
        %1437 = vmatprep.subr.mxu0 0.0
        %1438 = vmatpush1.xpose.msra.mxu0 %v1435
        %1439 = vmatprep.subr.mxu0 0.0
        %1440 = vmatpush1.xpose.msra.mxu0 0.0
        %1441 = vmatprep.subr.mxu0 0.0
        %1442 = vmatpush1.xpose.msra.mxu0 0.0
        %1443 = vmatprep.subr.mxu0 0.0
        %1444 = vmatpush1.xpose.msra.mxu0 0.0
        %1445 = vmatprep.subr.mxu0 0.0
        %1446 = vmatpush1.xpose.msra.mxu0 0.0
        %1447 = vmatprep.subr.mxu0 0.0
        %1448 = vmatpush1.xpose.msra.mxu0 0.0
        %1449 = vmatprep.subr.mxu0 0.0
        %1450 = vmatpush1.xpose.msra.mxu0 0.0
        %1451 = vmatprep.subr.mxu0 0.0
        %1452 = vmatpush1.xpose.msra.mxu0 0.0
        %1453 = vmatprep.subr.mxu0 0.0
        %1454 = vmatpush1.xpose.msra.mxu0 0.0
        %1455 = vmatprep.subr.mxu0 0.0
        %1456 = vmatpush1.xpose.msra.mxu0 0.0
        %1457 = vmatprep.subr.mxu0 0.0
        %1458 = vmatpush1.xpose.msra.mxu0 0.0
        %1459 = vmatprep.subr.mxu0 0.0
        %1460 = vmatpush1.xpose.msra.mxu0 0.0
        %1461 = vmatprep.subr.mxu0 0.0
        %1462 = vmatpush1.xpose.msra.mxu0 0.0
        %1463 = vmatprep.subr.mxu0 0.0
        %1464 = vmatpush1.xpose.msra.mxu0 0.0
        %1465 = vmatprep.subr.mxu0 0.0
        %1466 = vmatpush1.xpose.msra.mxu0 0.0
        %1467 = vmatprep.subr.mxu0 0.0
        %1468 = vmatpush1.xpose.msra.mxu0 0.0
        %1469 = vmatprep.subr.mxu0 0.0
        %1470 = vmatpush1.xpose.msra.mxu0 0.0
        %1471 = vmatprep.subr.mxu0 0.0
        %1472 = vmatpush1.xpose.msra.mxu0 0.0
        %1473 = vmatprep.subr.mxu0 0.0
        %1474 = vmatpush1.xpose.msra.mxu0 0.0
        %1475 = vmatprep.subr.mxu0 0.0
        %1476 = vmatpush1.xpose.msra.mxu0 0.0
        %1477 = vmatprep.subr.mxu0 0.0
        %1478 = vmatpush1.xpose.msra.mxu0 0.0
        %1479 = vmatprep.subr.mxu0 0.0
        %1480 = vmatpush1.xpose.msra.mxu0 0.0
        %1481 = vmatprep.subr.mxu0 0.0
        %1482 = vmatpush1.xpose.msra.mxu0 0.0
        %1483 = vmatprep.subr.mxu0 0.0
        %1484 = vmatpush1.xpose.msra.mxu0 0.0
        %1485 = vmatprep.subr.mxu0 0.0
        %1486 = vmatpush1.xpose.msra.mxu0 0.0
        %1487 = vmatprep.subr.mxu0 0.0
        %1488 = vmatpush1.xpose.msra.mxu0 0.0
        %1489 = vmatprep.subr.mxu0 0.0
        %1490 = vmatpush1.xpose.msra.mxu0 0.0
        %1491 = vmatprep.subr.mxu0 0.0
        %1492 = vmatpush1.xpose.msra.mxu0 0.0
        %1493 = vmatprep.subr.mxu0 0.0
        %1494 = vmatpush1.xpose.msra.mxu0 0.0
        %1495 = vmatprep.subr.mxu0 0.0
        %1496 = vmatpush1.xpose.msra.mxu0 0.0
        %1497 = vmatprep.subr.mxu0 0.0
        %1498 = vmatpush1.xpose.msra.mxu0 0.0
        %1499 = vmatprep.subr.mxu0 0.0
        %1500 = vmatpush1.xpose.msra.mxu0 0.0
        %1501 = vmatprep.mubr.f32.mxu0 0.0
        %1502 = vmatmul.mubr.f32.gmra.mrb[0].mxu0 %v1433
        %v1503 = vpop.f32.mrb[0].mxu0
        %v1504 = vadd.f32 0.0, %v1503
        %v1505 = vpop.f32.mrb[0].mxu0
        %1506 = vdwg.mxu0
        %v1507 = vmul.f32 %v1504, 0.35355338
        %v1508 = vsel %vm949, %v1507, -1e+30
        %v1509 = vsel %vm950, %v1508, -inf
        %1510 = vmax.xlane.f32.xlu0 %v1509
        %v1511 = vpop.xlane.xlu0 %1510
        %v1512 = vsub.f32 %v1508, %v1511
        %v1513 = vmul.f32 %v1512, 1.442695
        %v1514 = vpow.pop %v1513
        %v1515 = vsel %vm950, %v1514, 0.0
        %1516 = vadd.xlane.f32.xlu0 %v1515
        %v1517 = vpop.xlane.xlu0 %1516
        %v1518 = vrcp.pop %v1517
        %v1519 = vmul.f32 %v1514, %v1518
        %1520 = vrot.lane.b32.xlu0 %v939, 112
        %v1521 = vpop.permute.xlu0 %1520
        %v1524 = vsel %vm950, %v1519, 0
        %1526 = vmatprep.subr.mxu0 0.0
        %1527 = vmatpush1.msra.mxu0 %v1521
        %1528 = vmatprep.subr.mxu0 0.0
        %1529 = vmatpush1.msra.mxu0 0.0
        %1530 = vmatprep.subr.mxu0 0.0
        %1531 = vmatpush1.msra.mxu0 0.0
        %1532 = vmatprep.subr.mxu0 0.0
        %1533 = vmatpush1.msra.mxu0 0.0
        %1534 = vmatprep.subr.mxu0 0.0
        %1535 = vmatpush1.msra.mxu0 0.0
        %1536 = vmatprep.subr.mxu0 0.0
        %1537 = vmatpush1.msra.mxu0 0.0
        %1538 = vmatprep.subr.mxu0 0.0
        %1539 = vmatpush1.msra.mxu0 0.0
        %1540 = vmatprep.subr.mxu0 0.0
        %1541 = vmatpush1.msra.mxu0 0.0
        %1542 = vmatprep.subr.mxu0 0.0
        %1543 = vmatpush1.msra.mxu0 0.0
        %1544 = vmatprep.subr.mxu0 0.0
        %1545 = vmatpush1.msra.mxu0 0.0
        %1546 = vmatprep.subr.mxu0 0.0
        %1547 = vmatpush1.msra.mxu0 0.0
        %1548 = vmatprep.subr.mxu0 0.0
        %1549 = vmatpush1.msra.mxu0 0.0
        %1550 = vmatprep.subr.mxu0 0.0
        %1551 = vmatpush1.msra.mxu0 0.0
        %1552 = vmatprep.subr.mxu0 0.0
        %1553 = vmatpush1.msra.mxu0 0.0
        %1554 = vmatprep.subr.mxu0 0.0
        %1555 = vmatpush1.msra.mxu0 0.0
        %1556 = vmatprep.subr.mxu0 0.0
        %1557 = vmatpush1.msra.mxu0 0.0
        %1558 = vmatprep.subr.mxu0 0.0
        %1559 = vmatpush1.msra.mxu0 0.0
        %1560 = vmatprep.subr.mxu0 0.0
        %1561 = vmatpush1.msra.mxu0 0.0
        %1562 = vmatprep.subr.mxu0 0.0
        %1563 = vmatpush1.msra.mxu0 0.0
        %1564 = vmatprep.subr.mxu0 0.0
        %1565 = vmatpush1.msra.mxu0 0.0
        %1566 = vmatprep.subr.mxu0 0.0
        %1567 = vmatpush1.msra.mxu0 0.0
        %1568 = vmatprep.subr.mxu0 0.0
        %1569 = vmatpush1.msra.mxu0 0.0
        %1570 = vmatprep.subr.mxu0 0.0
        %1571 = vmatpush1.msra.mxu0 0.0
        %1572 = vmatprep.subr.mxu0 0.0
        %1573 = vmatpush1.msra.mxu0 0.0
        %1574 = vmatprep.subr.mxu0 0.0
        %1575 = vmatpush1.msra.mxu0 0.0
        %1576 = vmatprep.subr.mxu0 0.0
        %1577 = vmatpush1.msra.mxu0 0.0
        %1578 = vmatprep.subr.mxu0 0.0
        %1579 = vmatpush1.msra.mxu0 0.0
        %1580 = vmatprep.subr.mxu0 0.0
        %1581 = vmatpush1.msra.mxu0 0.0
        %1582 = vmatprep.subr.mxu0 0.0
        %1583 = vmatpush1.msra.mxu0 0.0
        %1584 = vmatprep.subr.mxu0 0.0
        %1585 = vmatpush1.msra.mxu0 0.0
        %1586 = vmatprep.subr.mxu0 0.0
        %1587 = vmatpush1.msra.mxu0 0.0
        %1588 = vmatprep.subr.mxu0 0.0
        %1589 = vmatpush1.msra.mxu0 0.0
        %1590 = vmatprep.mubr.f32.mxu0 0.0
        %1591 = vmatmul.mubr.f32.gmra.mrb[0].mxu0 %v1524
        %v1592 = vpop.f32.mrb[0].mxu0
        %v1593 = vadd.f32 0.0, %v1592
        %v1594 = vpop.f32.mrb[0].mxu0
        %1595 = vdwg.mxu0
        %v1596 = vld [vmem:[%s10 + $0x10] sm:$0xff]
        %v1598 = vsel %vm950, %v1593, 0
        %1600 = vmatprep.subr.mxu0 0.0
        %1601 = vmatpush1.msra.mxu0 %v1596
        %1602 = vmatprep.subr.mxu0 0.0
        %1603 = vmatpush1.msra.mxu0 0.0
        %1604 = vmatprep.subr.mxu0 0.0
        %1605 = vmatpush1.msra.mxu0 0.0
        %1606 = vmatprep.subr.mxu0 0.0
        %1607 = vmatpush1.msra.mxu0 0.0
        %1608 = vmatprep.subr.mxu0 0.0
        %1609 = vmatpush1.msra.mxu0 0.0
        %1610 = vmatprep.subr.mxu0 0.0
        %1611 = vmatpush1.msra.mxu0 0.0
        %1612 = vmatprep.subr.mxu0 0.0
        %1613 = vmatpush1.msra.mxu0 0.0
        %1614 = vmatprep.subr.mxu0 0.0
        %1615 = vmatpush1.msra.mxu0 0.0
        %1616 = vmatprep.subr.mxu0 0.0
        %1617 = vmatpush1.msra.mxu0 0.0
        %1618 = vmatprep.subr.mxu0 0.0
        %1619 = vmatpush1.msra.mxu0 0.0
        %1620 = vmatprep.subr.mxu0 0.0
        %1621 = vmatpush1.msra.mxu0 0.0
        %1622 = vmatprep.subr.mxu0 0.0
        %1623 = vmatpush1.msra.mxu0 0.0
        %1624 = vmatprep.subr.mxu0 0.0
        %1625 = vmatpush1.msra.mxu0 0.0
        %1626 = vmatprep.subr.mxu0 0.0
        %1627 = vmatpush1.msra.mxu0 0.0
        %1628 = vmatprep.subr.mxu0 0.0
        %1629 = vmatpush1.msra.mxu0 0.0
        %1630 = vmatprep.subr.mxu0 0.0
        %1631 = vmatpush1.msra.mxu0 0.0
        %1632 = vmatprep.subr.mxu0 0.0
        %1633 = vmatpush1.msra.mxu0 0.0
        %1634 = vmatprep.subr.mxu0 0.0
        %1635 = vmatpush1.msra.mxu0 0.0
        %1636 = vmatprep.subr.mxu0 0.0
        %1637 = vmatpush1.msra.mxu0 0.0
        %1638 = vmatprep.subr.mxu0 0.0
        %1639 = vmatpush1.msra.mxu0 0.0
        %1640 = vmatprep.subr.mxu0 0.0
        %1641 = vmatpush1.msra.mxu0 0.0
        %1642 = vmatprep.subr.mxu0 0.0
        %1643 = vmatpush1.msra.mxu0 0.0
        %1644 = vmatprep.subr.mxu0 0.0
        %1645 = vmatpush1.msra.mxu0 0.0
        %1646 = vmatprep.subr.mxu0 0.0
        %1647 = vmatpush1.msra.mxu0 0.0
        %1648 = vmatprep.subr.mxu0 0.0
        %1649 = vmatpush1.msra.mxu0 0.0
        %1650 = vmatprep.subr.mxu0 0.0
        %1651 = vmatpush1.msra.mxu0 0.0
        %1652 = vmatprep.subr.mxu0 0.0
        %1653 = vmatpush1.msra.mxu0 0.0
        %1654 = vmatprep.subr.mxu0 0.0
        %1655 = vmatpush1.msra.mxu0 0.0
        %1656 = vmatprep.subr.mxu0 0.0
        %1657 = vmatpush1.msra.mxu0 0.0
        %1658 = vmatprep.subr.mxu0 0.0
        %1659 = vmatpush1.msra.mxu0 0.0
        %1660 = vmatprep.subr.mxu0 0.0
        %1661 = vmatpush1.msra.mxu0 0.0
        %1662 = vmatprep.subr.mxu0 0.0
        %1663 = vmatpush1.msra.mxu0 0.0
        %1664 = vmatprep.mubr.f32.mxu0 0.0
        %1665 = vmatmul.mubr.f32.gmra.mrb[0].mxu0 %v1598
        %v1666 = vpop.f32.mrb[0].mxu0
        %v1667 = vadd.f32 0.0, %v1666
        %v1668 = vpop.f32.mrb[0].mxu0
        %1669 = vdwg.mxu0
        %v1670 = vadd.f32 %v1426, %v1667
        %1671 = vrot.lane.b32.xlu0 %v774, 104
        %v1672 = vpop.permute.xlu0 %1671
        %1673 = vrot.lane.b32.xlu0 %v858, 104
        %v1674 = vpop.permute.xlu0 %1673
        %v1675 = vsel %vm950, %v1672, 0
        %v1677 = vsel %vm950, %v1674, 0
        %1679 = vmatprep.subr.mxu0 0.0
        %1680 = vmatpush1.xpose.msra.mxu0 %v1677
        %1681 = vmatprep.subr.mxu0 0.0
        %1682 = vmatpush1.xpose.msra.mxu0 0.0
        %1683 = vmatprep.subr.mxu0 0.0
        %1684 = vmatpush1.xpose.msra.mxu0 0.0
        %1685 = vmatprep.subr.mxu0 0.0
        %1686 = vmatpush1.xpose.msra.mxu0 0.0
        %1687 = vmatprep.subr.mxu0 0.0
        %1688 = vmatpush1.xpose.msra.mxu0 0.0
        %1689 = vmatprep.subr.mxu0 0.0
        %1690 = vmatpush1.xpose.msra.mxu0 0.0
        %1691 = vmatprep.subr.mxu0 0.0
        %1692 = vmatpush1.xpose.msra.mxu0 0.0
        %1693 = vmatprep.subr.mxu0 0.0
        %1694 = vmatpush1.xpose.msra.mxu0 0.0
        %1695 = vmatprep.subr.mxu0 0.0
        %1696 = vmatpush1.xpose.msra.mxu0 0.0
        %1697 = vmatprep.subr.mxu0 0.0
        %1698 = vmatpush1.xpose.msra.mxu0 0.0
        %1699 = vmatprep.subr.mxu0 0.0
        %1700 = vmatpush1.xpose.msra.mxu0 0.0
        %1701 = vmatprep.subr.mxu0 0.0
        %1702 = vmatpush1.xpose.msra.mxu0 0.0
        %1703 = vmatprep.subr.mxu0 0.0
        %1704 = vmatpush1.xpose.msra.mxu0 0.0
        %1705 = vmatprep.subr.mxu0 0.0
        %1706 = vmatpush1.xpose.msra.mxu0 0.0
        %1707 = vmatprep.subr.mxu0 0.0
        %1708 = vmatpush1.xpose.msra.mxu0 0.0
        %1709 = vmatprep.subr.mxu0 0.0
        %1710 = vmatpush1.xpose.msra.mxu0 0.0
        %1711 = vmatprep.subr.mxu0 0.0
        %1712 = vmatpush1.xpose.msra.mxu0 0.0
        %1713 = vmatprep.subr.mxu0 0.0
        %1714 = vmatpush1.xpose.msra.mxu0 0.0
        %1715 = vmatprep.subr.mxu0 0.0
        %1716 = vmatpush1.xpose.msra.mxu0 0.0
        %1717 = vmatprep.subr.mxu0 0.0
        %1718 = vmatpush1.xpose.msra.mxu0 0.0
        %1719 = vmatprep.subr.mxu0 0.0
        %1720 = vmatpush1.xpose.msra.mxu0 0.0
        %1721 = vmatprep.subr.mxu0 0.0
        %1722 = vmatpush1.xpose.msra.mxu0 0.0
        %1723 = vmatprep.subr.mxu0 0.0
        %1724 = vmatpush1.xpose.msra.mxu0 0.0
        %1725 = vmatprep.subr.mxu0 0.0
        %1726 = vmatpush1.xpose.msra.mxu0 0.0
        %1727 = vmatprep.subr.mxu0 0.0
        %1728 = vmatpush1.xpose.msra.mxu0 0.0
        %1729 = vmatprep.subr.mxu0 0.0
        %1730 = vmatpush1.xpose.msra.mxu0 0.0
        %1731 = vmatprep.subr.mxu0 0.0
        %1732 = vmatpush1.xpose.msra.mxu0 0.0
        %1733 = vmatprep.subr.mxu0 0.0
        %1734 = vmatpush1.xpose.msra.mxu0 0.0
        %1735 = vmatprep.subr.mxu0 0.0
        %1736 = vmatpush1.xpose.msra.mxu0 0.0
        %1737 = vmatprep.subr.mxu0 0.0
        %1738 = vmatpush1.xpose.msra.mxu0 0.0
        %1739 = vmatprep.subr.mxu0 0.0
        %1740 = vmatpush1.xpose.msra.mxu0 0.0
        %1741 = vmatprep.subr.mxu0 0.0
        %1742 = vmatpush1.xpose.msra.mxu0 0.0
        %1743 = vmatprep.mubr.f32.mxu0 0.0
        %1744 = vmatmul.mubr.f32.gmra.mrb[0].mxu0 %v1675
        %v1745 = vpop.f32.mrb[0].mxu0
        %v1746 = vadd.f32 0.0, %v1745
        %v1747 = vpop.f32.mrb[0].mxu0
        %1748 = vdwg.mxu0
        %v1749 = vmul.f32 %v1746, 0.35355338
        %v1750 = vsel %vm949, %v1749, -1e+30
        %v1751 = vsel %vm950, %v1750, -inf
        %1752 = vmax.xlane.f32.xlu0 %v1751
        %v1753 = vpop.xlane.xlu0 %1752
        %v1754 = vsub.f32 %v1750, %v1753
        %v1755 = vmul.f32 %v1754, 1.442695
        %v1756 = vpow.pop %v1755
        %v1757 = vsel %vm950, %v1756, 0.0
        %1758 = vadd.xlane.f32.xlu0 %v1757
        %v1759 = vpop.xlane.xlu0 %1758
        %v1760 = vrcp.pop %v1759
        %v1761 = vmul.f32 %v1756, %v1760
        %1762 = vrot.lane.b32.xlu0 %v939, 104
        %v1763 = vpop.permute.xlu0 %1762
        %v1766 = vsel %vm950, %v1761, 0
        %1768 = vmatprep.subr.mxu0 0.0
        %1769 = vmatpush1.msra.mxu0 %v1763
        %1770 = vmatprep.subr.mxu0 0.0
        %1771 = vmatpush1.msra.mxu0 0.0
        %1772 = vmatprep.subr.mxu0 0.0
        %1773 = vmatpush1.msra.mxu0 0.0
        %1774 = vmatprep.subr.mxu0 0.0
        %1775 = vmatpush1.msra.mxu0 0.0
        %1776 = vmatprep.subr.mxu0 0.0
        %1777 = vmatpush1.msra.mxu0 0.0
        %1778 = vmatprep.subr.mxu0 0.0
        %1779 = vmatpush1.msra.mxu0 0.0
        %1780 = vmatprep.subr.mxu0 0.0
        %1781 = vmatpush1.msra.mxu0 0.0
        %1782 = vmatprep.subr.mxu0 0.0
        %1783 = vmatpush1.msra.mxu0 0.0
        %1784 = vmatprep.subr.mxu0 0.0
        %1785 = vmatpush1.msra.mxu0 0.0
        %1786 = vmatprep.subr.mxu0 0.0
        %1787 = vmatpush1.msra.mxu0 0.0
        %1788 = vmatprep.subr.mxu0 0.0
        %1789 = vmatpush1.msra.mxu0 0.0
        %1790 = vmatprep.subr.mxu0 0.0
        %1791 = vmatpush1.msra.mxu0 0.0
        %1792 = vmatprep.subr.mxu0 0.0
        %1793 = vmatpush1.msra.mxu0 0.0
        %1794 = vmatprep.subr.mxu0 0.0
        %1795 = vmatpush1.msra.mxu0 0.0
        %1796 = vmatprep.subr.mxu0 0.0
        %1797 = vmatpush1.msra.mxu0 0.0
        %1798 = vmatprep.subr.mxu0 0.0
        %1799 = vmatpush1.msra.mxu0 0.0
        %1800 = vmatprep.subr.mxu0 0.0
        %1801 = vmatpush1.msra.mxu0 0.0
        %1802 = vmatprep.subr.mxu0 0.0
        %1803 = vmatpush1.msra.mxu0 0.0
        %1804 = vmatprep.subr.mxu0 0.0
        %1805 = vmatpush1.msra.mxu0 0.0
        %1806 = vmatprep.subr.mxu0 0.0
        %1807 = vmatpush1.msra.mxu0 0.0
        %1808 = vmatprep.subr.mxu0 0.0
        %1809 = vmatpush1.msra.mxu0 0.0
        %1810 = vmatprep.subr.mxu0 0.0
        %1811 = vmatpush1.msra.mxu0 0.0
        %1812 = vmatprep.subr.mxu0 0.0
        %1813 = vmatpush1.msra.mxu0 0.0
        %1814 = vmatprep.subr.mxu0 0.0
        %1815 = vmatpush1.msra.mxu0 0.0
        %1816 = vmatprep.subr.mxu0 0.0
        %1817 = vmatpush1.msra.mxu0 0.0
        %1818 = vmatprep.subr.mxu0 0.0
        %1819 = vmatpush1.msra.mxu0 0.0
        %1820 = vmatprep.subr.mxu0 0.0
        %1821 = vmatpush1.msra.mxu0 0.0
        %1822 = vmatprep.subr.mxu0 0.0
        %1823 = vmatpush1.msra.mxu0 0.0
        %1824 = vmatprep.subr.mxu0 0.0
        %1825 = vmatpush1.msra.mxu0 0.0
        %1826 = vmatprep.subr.mxu0 0.0
        %1827 = vmatpush1.msra.mxu0 0.0
        %1828 = vmatprep.subr.mxu0 0.0
        %1829 = vmatpush1.msra.mxu0 0.0
        %1830 = vmatprep.subr.mxu0 0.0
        %1831 = vmatpush1.msra.mxu0 0.0
        %1832 = vmatprep.mubr.f32.mxu0 0.0
        %1833 = vmatmul.mubr.f32.gmra.mrb[0].mxu0 %v1766
        %v1834 = vpop.f32.mrb[0].mxu0
        %v1835 = vadd.f32 0.0, %v1834
        %v1836 = vpop.f32.mrb[0].mxu0
        %1837 = vdwg.mxu0
        %v1838 = vld [vmem:[%s10 + $0x18] sm:$0xff]
        %v1840 = vsel %vm950, %v1835, 0
        %1842 = vmatprep.subr.mxu0 0.0
        %1843 = vmatpush1.msra.mxu0 %v1838
        %1844 = vmatprep.subr.mxu0 0.0
        %1845 = vmatpush1.msra.mxu0 0.0
        %1846 = vmatprep.subr.mxu0 0.0
        %1847 = vmatpush1.msra.mxu0 0.0
        %1848 = vmatprep.subr.mxu0 0.0
        %1849 = vmatpush1.msra.mxu0 0.0
        %1850 = vmatprep.subr.mxu0 0.0
        %1851 = vmatpush1.msra.mxu0 0.0
        %1852 = vmatprep.subr.mxu0 0.0
        %1853 = vmatpush1.msra.mxu0 0.0
        %1854 = vmatprep.subr.mxu0 0.0
        %1855 = vmatpush1.msra.mxu0 0.0
        %1856 = vmatprep.subr.mxu0 0.0
        %1857 = vmatpush1.msra.mxu0 0.0
        %1858 = vmatprep.subr.mxu0 0.0
        %1859 = vmatpush1.msra.mxu0 0.0
        %1860 = vmatprep.subr.mxu0 0.0
        %1861 = vmatpush1.msra.mxu0 0.0
        %1862 = vmatprep.subr.mxu0 0.0
        %1863 = vmatpush1.msra.mxu0 0.0
        %1864 = vmatprep.subr.mxu0 0.0
        %1865 = vmatpush1.msra.mxu0 0.0
        %1866 = vmatprep.subr.mxu0 0.0
        %1867 = vmatpush1.msra.mxu0 0.0
        %1868 = vmatprep.subr.mxu0 0.0
        %1869 = vmatpush1.msra.mxu0 0.0
        %1870 = vmatprep.subr.mxu0 0.0
        %1871 = vmatpush1.msra.mxu0 0.0
        %1872 = vmatprep.subr.mxu0 0.0
        %1873 = vmatpush1.msra.mxu0 0.0
        %1874 = vmatprep.subr.mxu0 0.0
        %1875 = vmatpush1.msra.mxu0 0.0
        %1876 = vmatprep.subr.mxu0 0.0
        %1877 = vmatpush1.msra.mxu0 0.0
        %1878 = vmatprep.subr.mxu0 0.0
        %1879 = vmatpush1.msra.mxu0 0.0
        %1880 = vmatprep.subr.mxu0 0.0
        %1881 = vmatpush1.msra.mxu0 0.0
        %1882 = vmatprep.subr.mxu0 0.0
        %1883 = vmatpush1.msra.mxu0 0.0
        %1884 = vmatprep.subr.mxu0 0.0
        %1885 = vmatpush1.msra.mxu0 0.0
        %1886 = vmatprep.subr.mxu0 0.0
        %1887 = vmatpush1.msra.mxu0 0.0
        %1888 = vmatprep.subr.mxu0 0.0
        %1889 = vmatpush1.msra.mxu0 0.0
        %1890 = vmatprep.subr.mxu0 0.0
        %1891 = vmatpush1.msra.mxu0 0.0
        %1892 = vmatprep.subr.mxu0 0.0
        %1893 = vmatpush1.msra.mxu0 0.0
        %1894 = vmatprep.subr.mxu0 0.0
        %1895 = vmatpush1.msra.mxu0 0.0
        %1896 = vmatprep.subr.mxu0 0.0
        %1897 = vmatpush1.msra.mxu0 0.0
        %1898 = vmatprep.subr.mxu0 0.0
        %1899 = vmatpush1.msra.mxu0 0.0
        %1900 = vmatprep.subr.mxu0 0.0
        %1901 = vmatpush1.msra.mxu0 0.0
        %1902 = vmatprep.subr.mxu0 0.0
        %1903 = vmatpush1.msra.mxu0 0.0
        %1904 = vmatprep.subr.mxu0 0.0
        %1905 = vmatpush1.msra.mxu0 0.0
        %1906 = vmatprep.mubr.f32.mxu0 0.0
        %1907 = vmatmul.mubr.f32.gmra.mrb[0].mxu0 %v1840
        %v1908 = vpop.f32.mrb[0].mxu0
        %v1909 = vadd.f32 0.0, %v1908
        %v1910 = vpop.f32.mrb[0].mxu0
        %1911 = vdwg.mxu0
        %v1912 = vadd.f32 %v1670, %v1909
        %v1913 = vld [vmem:[%s11] sm:$0x1]
        %v1915 = vlaneseq
        %v1916 = vshrl.u32 %v1915, 7
        %v1917 = vsub.s32 0, %v1916
        %v1918 = vrot.slane %v1913, %v1917
        %v1920 = vadd.f32 %v1912, %v1918
        %v1921 = vadd.f32 %v645, %v1920
        %v1922 = vld [vmem:[%s12] sm:$0x1]
        %v1923 = vld [vmem:[%s13] sm:$0x1]
        %v1924 = vsel %vm649, %v1921, 0.0
        %1925 = vadd.xlane.f32.xlu0 %v1924
        %v1926 = vpop.xlane.xlu0 %1925
        %v1927 = vmul.f32 %v1926, %v653
        %v1928 = vsub.f32 %v1921, %v1927
        %v1929 = vmul.f32 %v1928, %v1928
        %v1930 = vsel %vm649, %v1929, 0.0
        %1931 = vadd.xlane.f32.xlu0 %v1930
        %v1932 = vpop.xlane.xlu0 %1931
        %v1933 = vmul.f32 %v1932, %v653
        %v1934 = vadd.f32 %v1933, 1e-05
        %v1935 = vrsqrt.pop %v1934
        %v1936 = vmul.f32 %v1928, %v1935
        %v1938 = vlaneseq
        %v1939 = vshrl.u32 %v1938, 7
        %v1940 = vsub.s32 0, %v1939
        %v1941 = vrot.slane %v1922, %v1940
        %v1943 = vmul.f32 %v1936, %v1941
        %v1945 = vlaneseq
        %v1946 = vshrl.u32 %v1945, 7
        %v1947 = vsub.s32 0, %v1946
        %v1948 = vrot.slane %v1923, %v1947
        %v1950 = vadd.f32 %v1943, %v1948
        %v1951 = vld [vmem:[%s14] sm:$0xff]
        %v1952 = vld [vmem:[%s14 + $0x8] sm:$0xff]
        %v1953 = vld [vmem:[%s14 + $0x10] sm:$0xff]
        %v1954 = vld [vmem:[%s14 + $0x18] sm:$0xff]
        %v1955 = vld [vmem:[%s15] sm:$0x1]
        %v1957 = vlaneseq
        %v1958 = vshrl.u32 %v1957, 7
        %v1959 = vsub.s32 0, %v1958
        %v1960 = vrot.slane %v1955, %v1959
        %v1963 = vsel %vm649, %v1950, 0
        %1965 = vmatprep.subr.mxu0 0.0
        %1966 = vmatpush1.msra.mxu0 %v1951
        %1967 = vmatprep.subr.mxu0 0.0
        %1968 = vmatpush1.msra.mxu0 %v1952
        %1969 = vmatprep.subr.mxu0 0.0
        %1970 = vmatpush1.msra.mxu0 %v1953
        %1971 = vmatprep.subr.mxu0 0.0
        %1972 = vmatpush1.msra.mxu0 %v1954
        %1973 = vmatprep.subr.mxu0 0.0
        %1974 = vmatpush1.msra.mxu0 0.0
        %1975 = vmatprep.subr.mxu0 0.0
        %1976 = vmatpush1.msra.mxu0 0.0
        %1977 = vmatprep.subr.mxu0 0.0
        %1978 = vmatpush1.msra.mxu0 0.0
        %1979 = vmatprep.subr.mxu0 0.0
        %1980 = vmatpush1.msra.mxu0 0.0
        %1981 = vmatprep.subr.mxu0 0.0
        %1982 = vmatpush1.msra.mxu0 0.0
        %1983 = vmatprep.subr.mxu0 0.0
        %1984 = vmatpush1.msra.mxu0 0.0
        %1985 = vmatprep.subr.mxu0 0.0
        %1986 = vmatpush1.msra.mxu0 0.0
        %1987 = vmatprep.subr.mxu0 0.0
        %1988 = vmatpush1.msra.mxu0 0.0
        %1989 = vmatprep.subr.mxu0 0.0
        %1990 = vmatpush1.msra.mxu0 0.0
        %1991 = vmatprep.subr.mxu0 0.0
        %1992 = vmatpush1.msra.mxu0 0.0
        %1993 = vmatprep.subr.mxu0 0.0
        %1994 = vmatpush1.msra.mxu0 0.0
        %1995 = vmatprep.subr.mxu0 0.0
        %1996 = vmatpush1.msra.mxu0 0.0
        %1997 = vmatprep.subr.mxu0 0.0
        %1998 = vmatpush1.msra.mxu0 0.0
        %1999 = vmatprep.subr.mxu0 0.0
        %2000 = vmatpush1.msra.mxu0 0.0
        %2001 = vmatprep.subr.mxu0 0.0
        %2002 = vmatpush1.msra.mxu0 0.0
        %2003 = vmatprep.subr.mxu0 0.0
        %2004 = vmatpush1.msra.mxu0 0.0
        %2005 = vmatprep.subr.mxu0 0.0
        %2006 = vmatpush1.msra.mxu0 0.0
        %2007 = vmatprep.subr.mxu0 0.0
        %2008 = vmatpush1.msra.mxu0 0.0
        %2009 = vmatprep.subr.mxu0 0.0
        %2010 = vmatpush1.msra.mxu0 0.0
        %2011 = vmatprep.subr.mxu0 0.0
        %2012 = vmatpush1.msra.mxu0 0.0
        %2013 = vmatprep.subr.mxu0 0.0
        %2014 = vmatpush1.msra.mxu0 0.0
        %2015 = vmatprep.subr.mxu0 0.0
        %2016 = vmatpush1.msra.mxu0 0.0
        %2017 = vmatprep.subr.mxu0 0.0
        %2018 = vmatpush1.msra.mxu0 0.0
        %2019 = vmatprep.subr.mxu0 0.0
        %2020 = vmatpush1.msra.mxu0 0.0
        %2021 = vmatprep.subr.mxu0 0.0
        %2022 = vmatpush1.msra.mxu0 0.0
        %2023 = vmatprep.subr.mxu0 0.0
        %2024 = vmatpush1.msra.mxu0 0.0
        %2025 = vmatprep.subr.mxu0 0.0
        %2026 = vmatpush1.msra.mxu0 0.0
        %2027 = vmatprep.subr.mxu0 0.0
        %2028 = vmatpush1.msra.mxu0 0.0
        %2029 = vmatprep.mubr.f32.mxu0 0.0
        %2030 = vmatmul.mubr.f32.gmra.mrb[0].mxu0 %v1963
        %v2031 = vpop.f32.mrb[0].mxu0
        %v2032 = vadd.f32 %v1960, %v2031
        %v2033 = vpop.f32.mrb[0].mxu0
        %2034 = vdwg.mxu0
        %v2035 = vmul.f32 %v2032, 0.5
        %v2036 = vmul.f32 %v2032, 0.044715
        %v2037 = vmul.f32 %v2036, %v2032
        %v2038 = vmul.f32 %v2037, %v2032
        %v2039 = vadd.f32 %v2032, %v2038
        %v2040 = vmul.f32 %v2039, 0.7978846
        %v2041 = vtanh.pop %v2040
        %v2042 = vadd.f32 %v2041, 1.0
        %v2043 = vmul.f32 %v2035, %v2042
        %v2044 = vld [vmem:[%s16] sm:$0xff]
        %v2045 = vld [vmem:[%s16 + $0x8] sm:$0xff]
        %v2046 = vld [vmem:[%s16 + $0x10] sm:$0xff]
        %v2047 = vld [vmem:[%s16 + $0x18] sm:$0xff]
        %v2048 = vld [vmem:[%s16 + $0x20] sm:$0xff]
        %v2049 = vld [vmem:[%s16 + $0x28] sm:$0xff]
        %v2050 = vld [vmem:[%s16 + $0x30] sm:$0xff]
        %v2051 = vld [vmem:[%s16 + $0x38] sm:$0xff]
        %v2052 = vld [vmem:[%s16 + $0x40] sm:$0xff]
        %v2053 = vld [vmem:[%s16 + $0x48] sm:$0xff]
        %v2054 = vld [vmem:[%s16 + $0x50] sm:$0xff]
        %v2055 = vld [vmem:[%s16 + $0x58] sm:$0xff]
        %v2056 = vld [vmem:[%s16 + $0x60] sm:$0xff]
        %v2057 = vld [vmem:[%s16 + $0x68] sm:$0xff]
        %v2058 = vld [vmem:[%s16 + $0x70] sm:$0xff]
        %v2059 = vld [vmem:[%s16 + $0x78] sm:$0xff]
        %v2060 = vld [vmem:[%s17] sm:$0x1]
        %v2062 = vlaneseq
        %v2063 = vshrl.u32 %v2062, 7
        %v2064 = vsub.s32 0, %v2063
        %v2065 = vrot.slane %v2060, %v2064
        %2067 = vmatprep.subr.mxu0 0.0
        %2068 = vmatpush1.msra.mxu0 %v2044
        %2069 = vmatprep.subr.mxu0 0.0
        %2070 = vmatpush1.msra.mxu0 %v2045
        %2071 = vmatprep.subr.mxu0 0.0
        %2072 = vmatpush1.msra.mxu0 %v2046
        %2073 = vmatprep.subr.mxu0 0.0
        %2074 = vmatpush1.msra.mxu0 %v2047
        %2075 = vmatprep.subr.mxu0 0.0
        %2076 = vmatpush1.msra.mxu0 %v2048
        %2077 = vmatprep.subr.mxu0 0.0
        %2078 = vmatpush1.msra.mxu0 %v2049
        %2079 = vmatprep.subr.mxu0 0.0
        %2080 = vmatpush1.msra.mxu0 %v2050
        %2081 = vmatprep.subr.mxu0 0.0
        %2082 = vmatpush1.msra.mxu0 %v2051
        %2083 = vmatprep.subr.mxu0 0.0
        %2084 = vmatpush1.msra.mxu0 %v2052
        %2085 = vmatprep.subr.mxu0 0.0
        %2086 = vmatpush1.msra.mxu0 %v2053
        %2087 = vmatprep.subr.mxu0 0.0
        %2088 = vmatpush1.msra.mxu0 %v2054
        %2089 = vmatprep.subr.mxu0 0.0
        %2090 = vmatpush1.msra.mxu0 %v2055
        %2091 = vmatprep.subr.mxu0 0.0
        %2092 = vmatpush1.msra.mxu0 %v2056
        %2093 = vmatprep.subr.mxu0 0.0
        %2094 = vmatpush1.msra.mxu0 %v2057
        %2095 = vmatprep.subr.mxu0 0.0
        %2096 = vmatpush1.msra.mxu0 %v2058
        %2097 = vmatprep.subr.mxu0 0.0
        %2098 = vmatpush1.msra.mxu0 %v2059
        %2099 = vmatprep.subr.mxu0 0.0
        %2100 = vmatpush1.msra.mxu0 0.0
        %2101 = vmatprep.subr.mxu0 0.0
        %2102 = vmatpush1.msra.mxu0 0.0
        %2103 = vmatprep.subr.mxu0 0.0
        %2104 = vmatpush1.msra.mxu0 0.0
        %2105 = vmatprep.subr.mxu0 0.0
        %2106 = vmatpush1.msra.mxu0 0.0
        %2107 = vmatprep.subr.mxu0 0.0
        %2108 = vmatpush1.msra.mxu0 0.0
        %2109 = vmatprep.subr.mxu0 0.0
        %2110 = vmatpush1.msra.mxu0 0.0
        %2111 = vmatprep.subr.mxu0 0.0
        %2112 = vmatpush1.msra.mxu0 0.0
        %2113 = vmatprep.subr.mxu0 0.0
        %2114 = vmatpush1.msra.mxu0 0.0
        %2115 = vmatprep.subr.mxu0 0.0
        %2116 = vmatpush1.msra.mxu0 0.0
        %2117 = vmatprep.subr.mxu0 0.0
        %2118 = vmatpush1.msra.mxu0 0.0
        %2119 = vmatprep.subr.mxu0 0.0
        %2120 = vmatpush1.msra.mxu0 0.0
        %2121 = vmatprep.subr.mxu0 0.0
        %2122 = vmatpush1.msra.mxu0 0.0
        %2123 = vmatprep.subr.mxu0 0.0
        %2124 = vmatpush1.msra.mxu0 0.0
        %2125 = vmatprep.subr.mxu0 0.0
        %2126 = vmatpush1.msra.mxu0 0.0
        %2127 = vmatprep.subr.mxu0 0.0
        %2128 = vmatpush1.msra.mxu0 0.0
        %2129 = vmatprep.subr.mxu0 0.0
        %2130 = vmatpush1.msra.mxu0 0.0
        %2131 = vmatprep.mubr.f32.mxu0 0.0
        %2132 = vmatmul.mubr.f32.gmra.mrb[0].mxu0 %v2043
        %v2133 = vpop.f32.mrb[0].mxu0
        %v2134 = vadd.f32 %v2065, %v2133
        %v2135 = vpop.f32.mrb[0].mxu0
        %2136 = vdwg.mxu0
        %v2137 = vadd.f32 %v1921, %v2134
        %2138 = vst.msk [vmem:[%s644] sm:$0xff] %vm649, %v2137
        %s2139 = sand.u32 %s450, 1
        %s2140 = scalar_lea.sflag [#allocation4], %s2139
        %s2141 = sand.u32 %s450, 1
        %s2142 = smul.addr %s2141, 8
        %s2143 = scalar_lea.vmem [#allocation7], %s2142
        // Predicated region
        $region101: #{tpu_custom_call.1} parent=91 // pred_check
          %p2144 = pneg %p460
        $region102: #{tpu_custom_call.1} parent=91 // pred_check_branch
          %2146 = sbr.rel (%p2144) target = $region104
        $region103: #{tpu_custom_call.1} parent=91 // pred_region
          %s2148 = ssub.s32 128, 128
          %2149 = vsyncadd %s2140, %s2148
          %s2150 = sadd.s32 %s43, %s42
          %s2151 = smul.addr %s2150, 128
          %s2152 = scalar_lea.hbm %s18, %s2151
          %s2154 = sshll.u32 %s2143, 4
          %s2155 = int_to_ptr.vmem [resolvable:$true] %s2154
          %2157 = dma.vmem_to_hbm [thread:$0]  %s2155, 128, %s2152, %s2140
        $region104: #{tpu_custom_call.1} parent=91 // pred_fallthru
          _
      $region92: #{tpu_custom_call.1} parent=5 // pred_fallthru
        _
      %p2158 = scmp.le.s32.totalorder 2, %s33
      // Predicated region
      $region105: #{tpu_custom_call.1} parent=5 // pred_check
        %p2159 = pneg %p2158
      $region106: #{tpu_custom_call.1} parent=5 // pred_check_branch
        %2161 = sbr.rel (%p2159) target = $region108
      $region107: #{tpu_custom_call.1} parent=5 // pred_region
        %s2162 = ssub.s32 %s33, 2
        // Predicated region
        $region109: #{tpu_custom_call.1} parent=107 // pred_check
          %p2163 = pneg %p466
        $region110: #{tpu_custom_call.1} parent=107 // pred_check_branch
          %2165 = sbr.rel (%p2163) target = $region112
        $region111: #{tpu_custom_call.1} parent=107 // pred_region
          %s2166 = sand.u32 %s451, 1
          %s2167 = scalar_lea.sflag [#allocation4], %s2166
          %s2168 = sand.u32 %s451, 1
          %s2169 = smul.addr %s2168, 8
          %s2170 = scalar_lea.vmem [#allocation7], %s2169
          %2171 = dma.done %s2167, 128
        $region112: #{tpu_custom_call.1} parent=107 // pred_fallthru
          _
      $region108: #{tpu_custom_call.1} parent=5 // pred_fallthru
        _
    $region6: #{tpu_custom_call.1} parent=1 // loop_footer
      %s37 = sadd.s32 1, %s33
    $region7: #{tpu_custom_call.1} parent=1 // loop_footer_branch
      %32 = sbr.rel target = $region3
    $region8: #{tpu_custom_call.1} parent=1 // loop_exit
      _
    %2172 = vsyncpa [#allocation3], 1
    %s2173 = scalar_lea.sflag [#allocation3], 1
    %2174 = vsyncpa %s2173, 1
    %2175 = vsyncpa [#allocation6], 1
    %s2176 = scalar_lea.sflag [#allocation6], 1
    %2177 = vsyncpa %s2176, 1
    %2178 = vsyncpa [#allocation4], 1
    %s2179 = scalar_lea.sflag [#allocation4], 1
    %2180 = vsyncpa %s2179, 1

</llo_original>
